<compile_context>
chip_gen: v5e
topology: v5e:2x2
jax: 0.10.0
libtpu: 0.0.40
codegen_flags: <defaults>
</compile_context>

<pallas_src>
import functools
import numpy as np
import jax
import jax.numpy as jnp
from jax import lax
from jax.experimental import pallas as pl
from jax.experimental.pallas import tpu as pltpu


def attn_prop_kernel(x_ref, s_ref, wx_ref, wkv_ref, wmm_ref, w2_ref,
                     bias_f_ref, bias_2f_ref, o_ref, attn_ref,
                     *, num_heads, head_dim):
    fd = num_heads * head_dim                       # F
    x = x_ref[...]                                  # (N, F)  f32
    s = s_ref[...]                                  # (M, F)  bf16 (cast in wrapper)

    # Fused x-side matmul: [q-projection | BN-folded conv1(x half)] -> (N, 3F).
    xz = jnp.dot(x, wx_ref[...], preferred_element_type=jnp.float32,
                 precision=lax.Precision.HIGHEST)
    q = xz[:, :fd] + bias_f_ref[0:1, :]             # (N, F)
    zx = xz[:, fd:]                                 # (N, 2F); conv1 bias folded later

    # Fused K|V projection on source (bf16 MXU operands, f32 accumulation).
    kv = jnp.dot(s, wkv_ref[...],
                 preferred_element_type=jnp.float32) + bias_2f_ref[0:1, :]
    k = kv[:, :fd].astype(jnp.bfloat16)
    v = kv[:, fd:].astype(jnp.bfloat16)

    # Scale q once (one (N, F) multiply) instead of per-head on (N, M) scores.
    qs = (q * (1.0 / (head_dim ** 0.5))).astype(jnp.bfloat16)

    # Multi-head scaled-dot-product attention; heads are contiguous slices.
    for h in range(num_heads):
        lo, hi = h * head_dim, (h + 1) * head_dim
        qh, kh, vh = qs[:, lo:hi], k[:, lo:hi], v[:, lo:hi]
        # Contract last dims directly (no explicit kh.T / XLU transpose).
        sc = lax.dot_general(qh, kh, (((1,), (1,)), ((), ())),
                             preferred_element_type=jnp.float32)
        sc = sc - jnp.max(sc, axis=-1, keepdims=True)
        p = jnp.exp(sc)
        p = p * pl.reciprocal(jnp.sum(p, axis=-1, keepdims=True), approx=True)
        oh = jnp.dot(p.astype(jnp.bfloat16), vh,
                     preferred_element_type=jnp.float32)
        attn_ref[:, lo:hi] = oh.astype(jnp.bfloat16)

    # Merge conv fused with conv1 message-half: one (N,F)@(F,2F) matmul (K = F).
    z = (zx
         + jnp.dot(attn_ref[...], wmm_ref[...],
                   preferred_element_type=jnp.float32)
         + bias_2f_ref[1:2, :])                     # BN + merge bias folded in
    z = jnp.maximum(z, 0.0)                         # ReLU
    out = jnp.dot(z, w2_ref[...], preferred_element_type=jnp.float32,
                  precision=lax.Precision.HIGHEST) + bias_f_ref[1:2, :]
    # TODO(synk): for production SuperGlue sizes (F=256, N,M ~ 1-2k keypoints) tile
    # queries / keys and use an online (flash-style) softmax so the (N,M) scores fit
    # v7x VMEM, and pad F to a multiple of 128 lanes when F < 128 for unmasked stores.
    o_ref[...] = out.astype(o_ref.dtype)


def attentional_propagation(x, source, params, *, num_heads):
    """x: (B, N, F), source: (B, M, F) channels-last.  Returns (B, N, F)."""
    B, N, F = x.shape
    _, M, _ = source.shape
    assert F % num_heads == 0
    head_dim = F // num_heads

    # K/V branch runs bf16 on the MXU anyway: move the cast to the wrapper so
    # the source DMA moves half the bytes and the kernel skips an (M, F) cast.
    source_bf16 = source.astype(jnp.bfloat16)

    def fixed(shape):
        nd = len(shape)
        return pl.BlockSpec(shape, lambda b: (0,) * nd)

    in_specs = [
        pl.BlockSpec((pl.Squeezed(), N, F), lambda b: (b, 0, 0)),   # x        (f32)
        pl.BlockSpec((pl.Squeezed(), M, F), lambda b: (b, 0, 0)),   # source   (bf16)
        fixed((F, 3 * F)),       # [Wq | BN-folded W1_x]          (f32)
        fixed((F, 2 * F)),       # [Wk | Wv]                      (bf16)
        fixed((F, 2 * F)),       # W_merge @ BN-folded W1_msg     (bf16)
        fixed((2 * F, F)),       # W2                             (f32)
        fixed((2, F)),           # rows: [b_q, b_2]
        fixed((2, 2 * F)),       # rows: [b_k|b_v, folded b1]
    ]
    out_spec = pl.BlockSpec((pl.Squeezed(), N, F), lambda b: (b, 0, 0))

    kernel = functools.partial(attn_prop_kernel, num_heads=num_heads,
                               head_dim=head_dim)
    return pl.pallas_call(
        kernel,
        out_shape=jax.ShapeDtypeStruct((B, N, F), jnp.float32),
        grid_spec=pltpu.PrefetchScalarGridSpec(
            num_scalar_prefetch=0,
            grid=(B,),
            in_specs=in_specs,
            out_specs=out_spec,
            scratch_shapes=[pltpu.VMEM((N, F), jnp.bfloat16)],   # per-head attn out
        ),
        compiler_params=pltpu.CompilerParams(
            dimension_semantics=("parallel",)),
    )(x, source_bf16, *params)


def make_params(key, F, H):
    """Deterministic synthetic parameters (PyTorch shapes), then repack/fuse for kernel."""
    dh = F // H
    ks = jax.random.split(key, 12)
    scale = 0.1
    # PyTorch-layout parameters: Conv1d weight (C_out, C_in), bias (C_out,).
    Wq = jax.random.normal(ks[0], (F, F), jnp.float32) * scale
    bq = jax.random.normal(ks[1], (F,), jnp.float32) * scale
    Wk = jax.random.normal(ks[2], (F, F), jnp.float32) * scale
    bk = jax.random.normal(ks[3], (F,), jnp.float32) * scale
    Wv = jax.random.normal(ks[4], (F, F), jnp.float32) * scale
    bv = jax.random.normal(ks[5], (F,), jnp.float32) * scale
    Wm = jax.random.normal(ks[6], (F, F), jnp.float32) * scale
    bm = jax.random.normal(ks[7], (F,), jnp.float32) * scale
    W1 = jax.random.normal(ks[8], (2 * F, 2 * F), jnp.float32) * scale
    b1 = jax.random.normal(ks[9], (2 * F,), jnp.float32) * scale
    W2 = jax.random.normal(ks[10], (F, 2 * F), jnp.float32) * scale
    b2 = jnp.zeros((F,), jnp.float32)      # nn.init.constant_(mlp[-1].bias, 0.0)
    # BatchNorm1d(2F) in eval mode.
    kb = jax.random.split(ks[11], 4)
    gamma = 1.0 + 0.1 * jax.random.normal(kb[0], (2 * F,), jnp.float32)
    beta = 0.1 * jax.random.normal(kb[1], (2 * F,), jnp.float32)
    run_mean = 0.1 * jax.random.normal(kb[2], (2 * F,), jnp.float32)
    run_var = 1.0 + 0.1 * jnp.abs(jax.random.normal(kb[3], (2 * F,), jnp.float32))
    eps = 1e-5

    pt = dict(Wq=Wq, bq=bq, Wk=Wk, bk=bk, Wv=Wv, bv=bv, Wm=Wm, bm=bm,
              W1=W1, b1=b1, W2=W2, b2=b2, gamma=gamma, beta=beta,
              mean=run_mean, var=run_var, eps=eps)

    # Head permutation: kernel head-contiguous channel c' = h*dh + d maps to
    # PyTorch `.view(B, dim, H, N)` channel c = d*H + h.
    perm = np.array([(cp % dh) * H + (cp // dh) for cp in range(F)], dtype=np.int32)

    hi = lax.Precision.HIGHEST
    bn_scale = gamma / jnp.sqrt(run_var + eps)
    bn_shift = beta - run_mean * bn_scale
    W1_t = W1.T                                      # (2F_in, 2F_out)
    w1x_bn = W1_t[:F, :] * bn_scale[None, :]         # x half, BN folded
    w1m_bn = W1_t[F:, :] * bn_scale[None, :]         # message half, BN folded

    w_x = jnp.concatenate([Wq.T[:, perm], w1x_bn], axis=1)                   # (F, 3F) f32
    w_kv = jnp.concatenate([Wk.T[:, perm], Wv.T[:, perm]],
                           axis=1).astype(jnp.bfloat16)                      # (F, 2F) bf16
    w_mm = jnp.dot(Wm.T[perm, :], w1m_bn, precision=hi).astype(jnp.bfloat16) # (F, 2F) bf16
    w2_t = W2.T                                                              # (2F, F) f32

    bias_f = jnp.stack([bq[perm], b2])                                       # (2, F)
    b_kv = jnp.concatenate([bk[perm], bv[perm]])
    b1_fold = b1 * bn_scale + bn_shift + jnp.dot(bm, w1m_bn, precision=hi)
    bias_2f = jnp.stack([b_kv, b1_fold])                                     # (2, 2F)

    kernel_params = (w_x, w_kv, w_mm, w2_t, bias_f, bias_2f)
    return pt, kernel_params


def torch_reference(x_bfn, s_bfn, pt, H):
    """Pure-JAX emulation of the PyTorch forward (channels-first), f32-accurate."""
    B, F, N = x_bfn.shape
    M = s_bfn.shape[2]
    dh = F // H
    hi = lax.Precision.HIGHEST

    def conv1d(t, w, b):
        return jnp.einsum('oc,bcn->bon', w, t, precision=hi) + b[None, :, None]

    q = conv1d(x_bfn, pt['Wq'], pt['bq']).reshape(B, dh, H, N)
    k = conv1d(s_bfn, pt['Wk'], pt['bk']).reshape(B, dh, H, M)
    v = conv1d(s_bfn, pt['Wv'], pt['bv']).reshape(B, dh, H, M)
    scores = jnp.einsum('bdhn,bdhm->bhnm', q, k, precision=hi) / (dh ** 0.5)
    prob = jax.nn.softmax(scores, axis=-1)
    o = jnp.einsum('bhnm,bdhm->bdhn', prob, v, precision=hi).reshape(B, dh * H, N)
    msg = conv1d(o, pt['Wm'], pt['bm'])
    cat = jnp.concatenate([x_bfn, msg], axis=1)
    z = conv1d(cat, pt['W1'], pt['b1'])
    z = ((z - pt['mean'][None, :, None])
         / jnp.sqrt(pt['var'] + pt['eps'])[None, :, None]
         * pt['gamma'][None, :, None] + pt['beta'][None, :, None])
    z = jax.nn.relu(z)
    return conv1d(z, pt['W2'], pt['b2'])


if __name__ == "__main__":
    B, F, H = 2, 32, 4     # feature_dim=32, num_heads=4
    N, M = 16, 24          # query length / source length

    key = jax.random.PRNGKey(0)
    k_x, k_s, k_p = jax.random.split(key, 3)
    x = jax.random.normal(k_x, (B, N, F), jnp.float32)        # channels-last
    source = jax.random.normal(k_s, (B, M, F), jnp.float32)   # channels-last

    pt_params, kernel_params = make_params(k_p, F, H)

    out = attentional_propagation(x, source, kernel_params, num_heads=H)
    out = jax.block_until_ready(out)                          # (B, N, F)

    # Cross-check against the PyTorch-semantics reference (channels-first, f32).
    ref = torch_reference(jnp.transpose(x, (0, 2, 1)),
                          jnp.transpose(source, (0, 2, 1)), pt_params, H)
    ref = jnp.transpose(ref, (0, 2, 1))                        # back to (B, N, F)

    # Tolerance covers bf16 MXU operands + approx reciprocal in the attention branch.
    if np.allclose(np.asarray(out), np.asarray(ref), rtol=2e-3, atol=2e-3):
        print("KERNEL_OK")
    else:
        err = float(np.max(np.abs(np.asarray(out) - np.asarray(ref))))
        print(f"MISMATCH max_abs_err={err}")
</pallas_src>

<mosaic_0001>
module attributes {stable_mosaic.version = 11 : i64} {
  func.func @attn_prop_kernel(%arg0: i32, %arg1: memref<1x16x32xf32, #tpu.memory_space<vmem>>, %arg2: memref<1x24x32xbf16, #tpu.memory_space<vmem>>, %arg3: memref<32x96xf32, #tpu.memory_space<vmem>>, %arg4: memref<32x64xbf16, #tpu.memory_space<vmem>>, %arg5: memref<32x64xbf16, #tpu.memory_space<vmem>>, %arg6: memref<64x32xf32, #tpu.memory_space<vmem>>, %arg7: memref<2x32xf32, #tpu.memory_space<vmem>>, %arg8: memref<2x64xf32, #tpu.memory_space<vmem>>, %arg9: memref<1x16x32xf32, #tpu.memory_space<vmem>>, %arg10: memref<16x32xbf16, #tpu.memory_space<vmem>>) attributes {dimension_semantics = [#tpu.dimension_semantics<parallel>], iteration_bounds = array<i64: 2>, scalar_prefetch = 0 : i64, scratch_operands = 1 : i64, tpu.core_type = #tpu.core_type<tc>, window_params = [{transform_indices = @transform_0, window_bounds = array<i64: 1, 16, 32>}, {transform_indices = @transform_1, window_bounds = array<i64: 1, 24, 32>}, {pipeline_mode = #tpu.pipeline_mode<synchronous>, transform_indices = @transform_2, window_bounds = array<i64: 32, 96>}, {pipeline_mode = #tpu.pipeline_mode<synchronous>, transform_indices = @transform_3, window_bounds = array<i64: 32, 64>}, {pipeline_mode = #tpu.pipeline_mode<synchronous>, transform_indices = @transform_4, window_bounds = array<i64: 32, 64>}, {pipeline_mode = #tpu.pipeline_mode<synchronous>, transform_indices = @transform_5, window_bounds = array<i64: 64, 32>}, {pipeline_mode = #tpu.pipeline_mode<synchronous>, transform_indices = @transform_6, window_bounds = array<i64: 2, 32>}, {pipeline_mode = #tpu.pipeline_mode<synchronous>, transform_indices = @transform_7, window_bounds = array<i64: 2, 64>}, {transform_indices = @transform_8, window_bounds = array<i64: 1, 16, 32>}]} {
    %c0 = arith.constant 0 : index
    %c0_0 = arith.constant 0 : index
    %c0_1 = arith.constant 0 : index
    %0 = vector.load %arg1[%c0, %c0_0, %c0_1] : memref<1x16x32xf32, #tpu.memory_space<vmem>>, vector<1x16x32xf32>
    %1 = vector.shape_cast %0 : vector<1x16x32xf32> to vector<16x32xf32>
    %c0_2 = arith.constant 0 : index
    %c0_3 = arith.constant 0 : index
    %c0_4 = arith.constant 0 : index
    %2 = vector.load %arg2[%c0_2, %c0_3, %c0_4] : memref<1x24x32xbf16, #tpu.memory_space<vmem>>, vector<1x24x32xbf16>
    %3 = vector.shape_cast %2 : vector<1x24x32xbf16> to vector<24x32xbf16>
    %c0_5 = arith.constant 0 : index
    %c0_6 = arith.constant 0 : index
    %4 = vector.load %arg3[%c0_5, %c0_6] : memref<32x96xf32, #tpu.memory_space<vmem>>, vector<32x96xf32>
    %cst = arith.constant dense<0.000000e+00> : vector<16x96xf32>
    %5 = tpu.matmul %1, %4, %cst {dimension_numbers = #tpu.dot_dimension_numbers<[1], [0], [0], [1], [0, 0, 1, 1], [], []>, precision = #tpu.contract_precision<fp32>} : vector<16x32xf32>, vector<32x96xf32>, vector<16x96xf32> -> vector<16x96xf32>
    %6 = vector.extract_strided_slice %5 {offsets = [0, 0], sizes = [16, 32], strides = [1, 1]} : vector<16x96xf32> to vector<16x32xf32>
    %c0_7 = arith.constant 0 : index
    %c0_8 = arith.constant 0 : index
    %7 = vector.load %arg7[%c0_7, %c0_8] : memref<2x32xf32, #tpu.memory_space<vmem>>, vector<1x32xf32>
    %8 = vector.broadcast %7 : vector<1x32xf32> to vector<16x32xf32>
    %9 = arith.addf %6, %8 : vector<16x32xf32>
    %10 = vector.extract_strided_slice %5 {offsets = [0, 32], sizes = [16, 64], strides = [1, 1]} : vector<16x96xf32> to vector<16x64xf32>
    %c0_9 = arith.constant 0 : index
    %c0_10 = arith.constant 0 : index
    %11 = vector.load %arg4[%c0_9, %c0_10] : memref<32x64xbf16, #tpu.memory_space<vmem>>, vector<32x64xbf16>
    %cst_11 = arith.constant dense<0.000000e+00> : vector<24x64xf32>
    %12 = tpu.matmul %3, %11, %cst_11 {dimension_numbers = #tpu.dot_dimension_numbers<[1], [0], [0], [1], [0, 0, 1, 1], [], []>} : vector<24x32xbf16>, vector<32x64xbf16>, vector<24x64xf32> -> vector<24x64xf32>
    %c0_12 = arith.constant 0 : index
    %c0_13 = arith.constant 0 : index
    %13 = vector.load %arg8[%c0_12, %c0_13] : memref<2x64xf32, #tpu.memory_space<vmem>>, vector<1x64xf32>
    %14 = vector.broadcast %13 : vector<1x64xf32> to vector<24x64xf32>
    %15 = arith.addf %12, %14 : vector<24x64xf32>
    %16 = vector.extract_strided_slice %15 {offsets = [0, 0], sizes = [24, 32], strides = [1, 1]} : vector<24x64xf32> to vector<24x32xf32>
    %17 = arith.truncf %16 : vector<24x32xf32> to vector<24x32xbf16>
    %18 = vector.extract_strided_slice %15 {offsets = [0, 32], sizes = [24, 32], strides = [1, 1]} : vector<24x64xf32> to vector<24x32xf32>
    %19 = arith.truncf %18 : vector<24x32xf32> to vector<24x32xbf16>
    %cst_14 = arith.constant 0.353553385 : f32
    %20 = vector.broadcast %cst_14 : f32 to vector<16x32xf32>
    %21 = arith.mulf %9, %20 : vector<16x32xf32>
    %22 = arith.truncf %21 : vector<16x32xf32> to vector<16x32xbf16>
    %23 = vector.extract_strided_slice %22 {offsets = [0, 0], sizes = [16, 8], strides = [1, 1]} : vector<16x32xbf16> to vector<16x8xbf16>
    %24 = vector.extract_strided_slice %17 {offsets = [0, 0], sizes = [24, 8], strides = [1, 1]} : vector<24x32xbf16> to vector<24x8xbf16>
    %25 = vector.extract_strided_slice %19 {offsets = [0, 0], sizes = [24, 8], strides = [1, 1]} : vector<24x32xbf16> to vector<24x8xbf16>
    %cst_15 = arith.constant dense<0.000000e+00> : vector<16x24xf32>
    %26 = tpu.matmul %23, %24, %cst_15 {dimension_numbers = #tpu.dot_dimension_numbers<[1], [1], [0], [0], [0, 0, 1, 0], [], []>} : vector<16x8xbf16>, vector<24x8xbf16>, vector<16x24xf32> -> vector<16x24xf32>
    %cst_16 = arith.constant dense<0xFF800000> : vector<16xf32>
    %27 = vector.multi_reduction <maximumf>, %26, %cst_16 [1] : vector<16x24xf32> to vector<16xf32>
    %28 = vector.shape_cast %27 : vector<16xf32> to vector<16x1xf32>
    %29 = vector.broadcast %28 : vector<16x1xf32> to vector<16x24xf32>
    %30 = arith.subf %26, %29 : vector<16x24xf32>
    %31 = math.exp %30 : vector<16x24xf32>
    %cst_17 = arith.constant dense<0.000000e+00> : vector<16xf32>
    %32 = vector.multi_reduction <add>, %31, %cst_17 [1] : vector<16x24xf32> to vector<16xf32>
    %33 = vector.shape_cast %32 : vector<16xf32> to vector<16x1xf32>
    %34 = tpu.reciprocal %33 {approx = true} : vector<16x1xf32> -> vector<16x1xf32>
    %35 = vector.broadcast %34 : vector<16x1xf32> to vector<16x24xf32>
    %36 = arith.mulf %31, %35 : vector<16x24xf32>
    %37 = arith.truncf %36 : vector<16x24xf32> to vector<16x24xbf16>
    %cst_18 = arith.constant dense<0.000000e+00> : vector<16x8xf32>
    %38 = tpu.matmul %37, %25, %cst_18 {dimension_numbers = #tpu.dot_dimension_numbers<[1], [0], [0], [1], [0, 0, 1, 1], [], []>} : vector<16x24xbf16>, vector<24x8xbf16>, vector<16x8xf32> -> vector<16x8xf32>
    %39 = arith.truncf %38 : vector<16x8xf32> to vector<16x8xbf16>
    %c0_19 = arith.constant 0 : index
    %c0_20 = arith.constant 0 : index
    %40 = vector.load %arg10[%c0_19, %c0_20] : memref<16x32xbf16, #tpu.memory_space<vmem>>, vector<16x8xbf16>
    tpu.vector_store %arg10[%c0_19, %c0_20], %39 {strides = array<i32>} : memref<16x32xbf16, #tpu.memory_space<vmem>>, vector<16x8xbf16>,
    %41 = vector.extract_strided_slice %22 {offsets = [0, 8], sizes = [16, 8], strides = [1, 1]} : vector<16x32xbf16> to vector<16x8xbf16>
    %42 = vector.extract_strided_slice %17 {offsets = [0, 8], sizes = [24, 8], strides = [1, 1]} : vector<24x32xbf16> to vector<24x8xbf16>
    %43 = vector.extract_strided_slice %19 {offsets = [0, 8], sizes = [24, 8], strides = [1, 1]} : vector<24x32xbf16> to vector<24x8xbf16>
    %cst_21 = arith.constant dense<0.000000e+00> : vector<16x24xf32>
    %44 = tpu.matmul %41, %42, %cst_21 {dimension_numbers = #tpu.dot_dimension_numbers<[1], [1], [0], [0], [0, 0, 1, 0], [], []>} : vector<16x8xbf16>, vector<24x8xbf16>, vector<16x24xf32> -> vector<16x24xf32>
    %cst_22 = arith.constant dense<0xFF800000> : vector<16xf32>
    %45 = vector.multi_reduction <maximumf>, %44, %cst_22 [1] : vector<16x24xf32> to vector<16xf32>
    %46 = vector.shape_cast %45 : vector<16xf32> to vector<16x1xf32>
    %47 = vector.broadcast %46 : vector<16x1xf32> to vector<16x24xf32>
    %48 = arith.subf %44, %47 : vector<16x24xf32>
    %49 = math.exp %48 : vector<16x24xf32>
    %cst_23 = arith.constant dense<0.000000e+00> : vector<16xf32>
    %50 = vector.multi_reduction <add>, %49, %cst_23 [1] : vector<16x24xf32> to vector<16xf32>
    %51 = vector.shape_cast %50 : vector<16xf32> to vector<16x1xf32>
    %52 = tpu.reciprocal %51 {approx = true} : vector<16x1xf32> -> vector<16x1xf32>
    %53 = vector.broadcast %52 : vector<16x1xf32> to vector<16x24xf32>
    %54 = arith.mulf %49, %53 : vector<16x24xf32>
    %55 = arith.truncf %54 : vector<16x24xf32> to vector<16x24xbf16>
    %cst_24 = arith.constant dense<0.000000e+00> : vector<16x8xf32>
    %56 = tpu.matmul %55, %43, %cst_24 {dimension_numbers = #tpu.dot_dimension_numbers<[1], [0], [0], [1], [0, 0, 1, 1], [], []>} : vector<16x24xbf16>, vector<24x8xbf16>, vector<16x8xf32> -> vector<16x8xf32>
    %57 = arith.truncf %56 : vector<16x8xf32> to vector<16x8xbf16>
    %c0_25 = arith.constant 0 : index
    %c8 = arith.constant 8 : index
    %58 = vector.load %arg10[%c0_25, %c8] : memref<16x32xbf16, #tpu.memory_space<vmem>>, vector<16x8xbf16>
    tpu.vector_store %arg10[%c0_25, %c8], %57 {strides = array<i32>} : memref<16x32xbf16, #tpu.memory_space<vmem>>, vector<16x8xbf16>,
    %59 = vector.extract_strided_slice %22 {offsets = [0, 16], sizes = [16, 8], strides = [1, 1]} : vector<16x32xbf16> to vector<16x8xbf16>
    %60 = vector.extract_strided_slice %17 {offsets = [0, 16], sizes = [24, 8], strides = [1, 1]} : vector<24x32xbf16> to vector<24x8xbf16>
    %61 = vector.extract_strided_slice %19 {offsets = [0, 16], sizes = [24, 8], strides = [1, 1]} : vector<24x32xbf16> to vector<24x8xbf16>
    %cst_26 = arith.constant dense<0.000000e+00> : vector<16x24xf32>
    %62 = tpu.matmul %59, %60, %cst_26 {dimension_numbers = #tpu.dot_dimension_numbers<[1], [1], [0], [0], [0, 0, 1, 0], [], []>} : vector<16x8xbf16>, vector<24x8xbf16>, vector<16x24xf32> -> vector<16x24xf32>
    %cst_27 = arith.constant dense<0xFF800000> : vector<16xf32>
    %63 = vector.multi_reduction <maximumf>, %62, %cst_27 [1] : vector<16x24xf32> to vector<16xf32>
    %64 = vector.shape_cast %63 : vector<16xf32> to vector<16x1xf32>
    %65 = vector.broadcast %64 : vector<16x1xf32> to vector<16x24xf32>
    %66 = arith.subf %62, %65 : vector<16x24xf32>
    %67 = math.exp %66 : vector<16x24xf32>
    %cst_28 = arith.constant dense<0.000000e+00> : vector<16xf32>
    %68 = vector.multi_reduction <add>, %67, %cst_28 [1] : vector<16x24xf32> to vector<16xf32>
    %69 = vector.shape_cast %68 : vector<16xf32> to vector<16x1xf32>
    %70 = tpu.reciprocal %69 {approx = true} : vector<16x1xf32> -> vector<16x1xf32>
    %71 = vector.broadcast %70 : vector<16x1xf32> to vector<16x24xf32>
    %72 = arith.mulf %67, %71 : vector<16x24xf32>
    %73 = arith.truncf %72 : vector<16x24xf32> to vector<16x24xbf16>
    %cst_29 = arith.constant dense<0.000000e+00> : vector<16x8xf32>
    %74 = tpu.matmul %73, %61, %cst_29 {dimension_numbers = #tpu.dot_dimension_numbers<[1], [0], [0], [1], [0, 0, 1, 1], [], []>} : vector<16x24xbf16>, vector<24x8xbf16>, vector<16x8xf32> -> vector<16x8xf32>
    %75 = arith.truncf %74 : vector<16x8xf32> to vector<16x8xbf16>
    %c0_30 = arith.constant 0 : index
    %c16 = arith.constant 16 : index
    %76 = vector.load %arg10[%c0_30, %c16] : memref<16x32xbf16, #tpu.memory_space<vmem>>, vector<16x8xbf16>
    tpu.vector_store %arg10[%c0_30, %c16], %75 {strides = array<i32>} : memref<16x32xbf16, #tpu.memory_space<vmem>>, vector<16x8xbf16>,
    %77 = vector.extract_strided_slice %22 {offsets = [0, 24], sizes = [16, 8], strides = [1, 1]} : vector<16x32xbf16> to vector<16x8xbf16>
    %78 = vector.extract_strided_slice %17 {offsets = [0, 24], sizes = [24, 8], strides = [1, 1]} : vector<24x32xbf16> to vector<24x8xbf16>
    %79 = vector.extract_strided_slice %19 {offsets = [0, 24], sizes = [24, 8], strides = [1, 1]} : vector<24x32xbf16> to vector<24x8xbf16>
    %cst_31 = arith.constant dense<0.000000e+00> : vector<16x24xf32>
    %80 = tpu.matmul %77, %78, %cst_31 {dimension_numbers = #tpu.dot_dimension_numbers<[1], [1], [0], [0], [0, 0, 1, 0], [], []>} : vector<16x8xbf16>, vector<24x8xbf16>, vector<16x24xf32> -> vector<16x24xf32>
    %cst_32 = arith.constant dense<0xFF800000> : vector<16xf32>
    %81 = vector.multi_reduction <maximumf>, %80, %cst_32 [1] : vector<16x24xf32> to vector<16xf32>
    %82 = vector.shape_cast %81 : vector<16xf32> to vector<16x1xf32>
    %83 = vector.broadcast %82 : vector<16x1xf32> to vector<16x24xf32>
    %84 = arith.subf %80, %83 : vector<16x24xf32>
    %85 = math.exp %84 : vector<16x24xf32>
    %cst_33 = arith.constant dense<0.000000e+00> : vector<16xf32>
    %86 = vector.multi_reduction <add>, %85, %cst_33 [1] : vector<16x24xf32> to vector<16xf32>
    %87 = vector.shape_cast %86 : vector<16xf32> to vector<16x1xf32>
    %88 = tpu.reciprocal %87 {approx = true} : vector<16x1xf32> -> vector<16x1xf32>
    %89 = vector.broadcast %88 : vector<16x1xf32> to vector<16x24xf32>
    %90 = arith.mulf %85, %89 : vector<16x24xf32>
    %91 = arith.truncf %90 : vector<16x24xf32> to vector<16x24xbf16>
    %cst_34 = arith.constant dense<0.000000e+00> : vector<16x8xf32>
    %92 = tpu.matmul %91, %79, %cst_34 {dimension_numbers = #tpu.dot_dimension_numbers<[1], [0], [0], [1], [0, 0, 1, 1], [], []>} : vector<16x24xbf16>, vector<24x8xbf16>, vector<16x8xf32> -> vector<16x8xf32>
    %93 = arith.truncf %92 : vector<16x8xf32> to vector<16x8xbf16>
    %c0_35 = arith.constant 0 : index
    %c24 = arith.constant 24 : index
    %94 = vector.load %arg10[%c0_35, %c24] : memref<16x32xbf16, #tpu.memory_space<vmem>>, vector<16x8xbf16>
    tpu.vector_store %arg10[%c0_35, %c24], %93 {strides = array<i32>} : memref<16x32xbf16, #tpu.memory_space<vmem>>, vector<16x8xbf16>,
    %c0_36 = arith.constant 0 : index
    %c0_37 = arith.constant 0 : index
    %95 = vector.load %arg10[%c0_36, %c0_37] : memref<16x32xbf16, #tpu.memory_space<vmem>>, vector<16x32xbf16>
    %c0_38 = arith.constant 0 : index
    %c0_39 = arith.constant 0 : index
    %96 = vector.load %arg5[%c0_38, %c0_39] : memref<32x64xbf16, #tpu.memory_space<vmem>>, vector<32x64xbf16>
    %cst_40 = arith.constant dense<0.000000e+00> : vector<16x64xf32>
    %97 = tpu.matmul %95, %96, %cst_40 {dimension_numbers = #tpu.dot_dimension_numbers<[1], [0], [0], [1], [0, 0, 1, 1], [], []>} : vector<16x32xbf16>, vector<32x64xbf16>, vector<16x64xf32> -> vector<16x64xf32>
    %98 = arith.addf %10, %97 : vector<16x64xf32>
    %c1 = arith.constant 1 : index
    %c0_41 = arith.constant 0 : index
    %99 = vector.load %arg8[%c1, %c0_41] : memref<2x64xf32, #tpu.memory_space<vmem>>, vector<1x64xf32>
    %100 = vector.broadcast %99 : vector<1x64xf32> to vector<16x64xf32>
    %101 = arith.addf %98, %100 : vector<16x64xf32>
    %cst_42 = arith.constant 0.000000e+00 : f32
    %102 = vector.broadcast %cst_42 : f32 to vector<16x64xf32>
    %103 = arith.maximumf %101, %102 : vector<16x64xf32>
    %c0_43 = arith.constant 0 : index
    %c0_44 = arith.constant 0 : index
    %104 = vector.load %arg6[%c0_43, %c0_44] : memref<64x32xf32, #tpu.memory_space<vmem>>, vector<64x32xf32>
    %cst_45 = arith.constant dense<0.000000e+00> : vector<16x32xf32>
    %105 = tpu.matmul %103, %104, %cst_45 {dimension_numbers = #tpu.dot_dimension_numbers<[1], [0], [0], [1], [0, 0, 1, 1], [], []>, precision = #tpu.contract_precision<fp32>} : vector<16x64xf32>, vector<64x32xf32>, vector<16x32xf32> -> vector<16x32xf32>
    %c1_46 = arith.constant 1 : index
    %c0_47 = arith.constant 0 : index
    %106 = vector.load %arg7[%c1_46, %c0_47] : memref<2x32xf32, #tpu.memory_space<vmem>>, vector<1x32xf32>
    %107 = vector.broadcast %106 : vector<1x32xf32> to vector<16x32xf32>
    %108 = arith.addf %105, %107 : vector<16x32xf32>
    %c0_48 = arith.constant 0 : index
    %c0_49 = arith.constant 0 : index
    %c0_50 = arith.constant 0 : index
    %109 = vector.load %arg9[%c0_48, %c0_49, %c0_50] : memref<1x16x32xf32, #tpu.memory_space<vmem>>, vector<1x16x32xf32>
    %110 = vector.shape_cast %109 : vector<1x16x32xf32> to vector<16x32xf32>
    %111 = vector.shape_cast %108 : vector<16x32xf32> to vector<1x16x32xf32>
    tpu.vector_store %arg9[%c0_48, %c0_49, %c0_50], %111 {strides = array<i32>} : memref<1x16x32xf32, #tpu.memory_space<vmem>>, vector<1x16x32xf32>,
    return
  }
  func.func @transform_0(%arg0: i32) -> (i32, i32, i32) {
    %c0_i32 = arith.constant 0 : i32
    %c0_i32_0 = arith.constant 0 : i32
    %c0_i32_1 = arith.constant 0 : i32
    return %arg0, %c0_i32, %c0_i32_0 : i32, i32, i32
  }
  func.func @transform_1(%arg0: i32) -> (i32, i32, i32) {
    %c0_i32 = arith.constant 0 : i32
    %c0_i32_0 = arith.constant 0 : i32
    %c0_i32_1 = arith.constant 0 : i32
    return %arg0, %c0_i32, %c0_i32_0 : i32, i32, i32
  }
  func.func @transform_2(%arg0: i32) -> (i32, i32) {
    %c0_i32 = arith.constant 0 : i32
    %c0_i32_0 = arith.constant 0 : i32
    %c0_i32_1 = arith.constant 0 : i32
    return %c0_i32, %c0_i32_0 : i32, i32
  }
  func.func @transform_3(%arg0: i32) -> (i32, i32) {
    %c0_i32 = arith.constant 0 : i32
    %c0_i32_0 = arith.constant 0 : i32
    %c0_i32_1 = arith.constant 0 : i32
    return %c0_i32, %c0_i32_0 : i32, i32
  }
  func.func @transform_4(%arg0: i32) -> (i32, i32) {
    %c0_i32 = arith.constant 0 : i32
    %c0_i32_0 = arith.constant 0 : i32
    %c0_i32_1 = arith.constant 0 : i32
    return %c0_i32, %c0_i32_0 : i32, i32
  }
  func.func @transform_5(%arg0: i32) -> (i32, i32) {
    %c0_i32 = arith.constant 0 : i32
    %c0_i32_0 = arith.constant 0 : i32
    %c0_i32_1 = arith.constant 0 : i32
    return %c0_i32, %c0_i32_0 : i32, i32
  }
  func.func @transform_6(%arg0: i32) -> (i32, i32) {
    %c0_i32 = arith.constant 0 : i32
    %c0_i32_0 = arith.constant 0 : i32
    %c0_i32_1 = arith.constant 0 : i32
    return %c0_i32, %c0_i32_0 : i32, i32
  }
  func.func @transform_7(%arg0: i32) -> (i32, i32) {
    %c0_i32 = arith.constant 0 : i32
    %c0_i32_0 = arith.constant 0 : i32
    %c0_i32_1 = arith.constant 0 : i32
    return %c0_i32, %c0_i32_0 : i32, i32
  }
  func.func @transform_8(%arg0: i32) -> (i32, i32, i32) {
    %c0_i32 = arith.constant 0 : i32
    %c0_i32_0 = arith.constant 0 : i32
    %c0_i32_1 = arith.constant 0 : i32
    return %arg0, %c0_i32, %c0_i32_0 : i32, i32, i32
  }
}

</mosaic_0001>

<llo_original>
// kernel: tpu_custom_call.1
$region0: #{tpu_custom_call.1}
  #allocation0 [shape = 'u32[]', space=smem, size = 0x4, offset = 0x4, fixed_abs, tag = 'smem constant byte address 0x4 - core index']
  #allocation1 [shape = 'u32[72,128]{1,0:T(1,128)}', space=vmem, size = 0x9000, scoped, tag = 'internal scratch']
  #allocation2 [shape = 'bf16[16,32]{1,0:T(8,128)(2,1)}', space=vmem, size = 0x1000, scoped, tag = 'scratch operand']
  %s0 = inlined_call_operand.vmem [shape: f32[2,16,32], index: 0, kind: input, shape index: {}]
  %s1 = inlined_call_operand.vmem [shape: bf16[2,24,32], index: 1, kind: input, shape index: {}]
  %s2 = inlined_call_operand.vmem [shape: f32[32,96], index: 2, kind: input, shape index: {}]
  %s3 = inlined_call_operand.hbm [shape: bf16[32,64], index: 3, kind: input, shape index: {}]
  %s4 = inlined_call_operand.hbm [shape: bf16[32,64], index: 4, kind: input, shape index: {}]
  %s5 = inlined_call_operand.vmem [shape: f32[64,32], index: 5, kind: input, shape index: {}]
  %s6 = inlined_call_operand.vmem [shape: f32[2,32], index: 6, kind: input, shape index: {}]
  %s7 = inlined_call_operand.vmem [shape: f32[2,64], index: 7, kind: input, shape index: {}]
  %s8 = inlined_call_operand.hbm [shape: f32[2,16,32], index: 8, kind: output, shape index: {}]
  %s9 = sld [smem:[#allocation0]]
  $region73: #{tpu_custom_call.1} parent=0
    _
  %s11 = ssub.s32 1, %s9
  %s12 = scalar_select 0, %s11, %s9
  $region1: #{tpu_custom_call.1} parent=0
    #allocation3 [shape = 'u8[8192]{0}', space=vmem, size = 0x2000, scoped, tag = 'input window, operand 3, single buffered']
    #allocation4 [shape = 's32[2]{0}', space=sflag, size = 0x8, scoped, tag = 'scoped memory for tpu_custom_call.1']
    #allocation5 [shape = 's32[2]{0}', space=sflag, size = 0x8, scoped, tag = 'scoped memory for tpu_custom_call.1']
    #allocation6 [shape = 'u8[8192]{0}', space=vmem, size = 0x2000, scoped, tag = 'input window, operand 4, single buffered']
    #allocation7 [shape = 's32[1]{0}', space=sflag, size = 0x4, scoped, tag = 'scoped memory for tpu_custom_call.1']
    #allocation8 [shape = 'u8[16384]{0}', space=vmem, size = 0x4000, scoped, tag = 'output window, operand 0']
    %13 = vsyncpa [#allocation4], 0
    %14 = vsyncpa [#allocation7], 0
    %15 = vsyncpa [#allocation5], 0
    %s16 = scalar_lea.sflag [#allocation5], 1
    %17 = vsyncpa %s16, 0
    loop: start=0, step=1, limit=4
    $region2: #{tpu_custom_call.1} parent=1 // loop_pre_header
      _
    $region3: #{tpu_custom_call.1} parent=1 // loop_header
      %s19 = sphi 0, %s23
      %p20 = scmp.ge.s32.totalorder %s19, 4
      %s29 = sphi 0, %s31
      %s32 = sphi 0, %s29
      %s33 = sphi 0, %s32
      %s49 = sphi 0, %s33
      %s55 = sphi 0, %s57
      %s58 = sphi 0, %s55
      %s59 = sphi 0, %s58
      %s75 = sphi 0, %s59
      %s79 = sphi 0, %s79
      %s81 = sphi 0, %s79
      %s82 = sphi 0, %s81
      %s96 = sphi 0, %s82
      %s100 = sphi 0, %s100
      %s102 = sphi 0, %s100
      %s103 = sphi 0, %s102
      %s117 = sphi 0, %s103
      %s121 = sphi 0, %s121
      %s123 = sphi 0, %s121
      %s124 = sphi 0, %s123
      %s138 = sphi 0, %s124
      %s142 = sphi 0, %s142
      %s144 = sphi 0, %s142
      %s145 = sphi 0, %s144
      %s159 = sphi 0, %s145
      %s163 = sphi 0, %s163
      %s165 = sphi 0, %s163
      %s166 = sphi 0, %s165
      %s180 = sphi 0, %s166
      %s184 = sphi 0, %s184
      %s186 = sphi 0, %s184
      %s187 = sphi 0, %s186
      %s201 = sphi 0, %s187
      %s207 = sphi 0, %s209
      %s210 = sphi 0, %s207
      %s211 = sphi 0, %s210
      %s227 = sphi 0, %s211
    $region4: #{tpu_custom_call.1} parent=1 // loop_header_branch
      %22 = sbr.rel (%p20) target = $region8
    $region5: #{tpu_custom_call.1} parent=1 // loop_body
      %s24 = ssub.s32 %s19, 1
      %s25 = ssub.s32 %s19, 2
      %s26 = sadd.s32 %s19, 1
      %s27 = ssub.s32 %s19, %s26
      %p28 = scmp.eq.s32.totalorder %s27, 0
      %s30 = sadd.s32 %s29, 1
      %s31 = scalar_select %p28, %s29, %s30
      %p34 = pneg %p28
      %p35 = scmp.eq.s32.totalorder %s19, 1
      %p36 = por %p34, %p35
      %p37 = scmp.ne.s32.totalorder %s29, %s32
      %p38 = scmp.eq.s32.totalorder %s19, 0
      %p39 = por %p37, %p38
      %p40 = scmp.ne.s32.totalorder %s29, %s32
      %p41 = scmp.eq.s32.totalorder %s24, 1
      %p42 = por %p40, %p41
      %p43 = scmp.ne.s32.totalorder %s32, %s33
      %p44 = scmp.eq.s32.totalorder %s24, 0
      %p45 = por %p43, %p44
      %p46 = scmp.ne.s32.totalorder %s32, %s33
      %p47 = scmp.eq.s32.totalorder %s25, 1
      %p48 = por %p46, %p47
      %p50 = scmp.ne.s32.totalorder %s33, %s49
      %p51 = scmp.eq.s32.totalorder %s25, 0
      %p52 = por %p50, %p51
      %s53 = ssub.s32 %s19, %s26
      %p54 = scmp.eq.s32.totalorder %s53, 0
      %s56 = sadd.s32 %s55, 1
      %s57 = scalar_select %p54, %s55, %s56
      %p60 = pneg %p54
      %p61 = scmp.eq.s32.totalorder %s19, 1
      %p62 = por %p60, %p61
      %p63 = scmp.ne.s32.totalorder %s55, %s58
      %p64 = scmp.eq.s32.totalorder %s19, 0
      %p65 = por %p63, %p64
      %p66 = scmp.ne.s32.totalorder %s55, %s58
      %p67 = scmp.eq.s32.totalorder %s24, 1
      %p68 = por %p66, %p67
      %p69 = scmp.ne.s32.totalorder %s58, %s59
      %p70 = scmp.eq.s32.totalorder %s24, 0
      %p71 = por %p69, %p70
      %p72 = scmp.ne.s32.totalorder %s58, %s59
      %p73 = scmp.eq.s32.totalorder %s25, 1
      %p74 = por %p72, %p73
      %p76 = scmp.ne.s32.totalorder %s59, %s75
      %p77 = scmp.eq.s32.totalorder %s25, 0
      %p78 = por %p76, %p77
      %s80 = sadd.s32 %s79, 1
      %p83 = scmp.eq.s32.totalorder %s19, 1
      %p84 = scmp.ne.s32.totalorder %s79, %s81
      %p85 = scmp.eq.s32.totalorder %s19, 0
      %p86 = por %p84, %p85
      %p87 = scmp.ne.s32.totalorder %s79, %s81
      %p88 = scmp.eq.s32.totalorder %s24, 1
      %p89 = por %p87, %p88
      %p90 = scmp.ne.s32.totalorder %s81, %s82
      %p91 = scmp.eq.s32.totalorder %s24, 0
      %p92 = por %p90, %p91
      %p93 = scmp.ne.s32.totalorder %s81, %s82
      %p94 = scmp.eq.s32.totalorder %s25, 1
      %p95 = por %p93, %p94
      %p97 = scmp.ne.s32.totalorder %s82, %s96
      %p98 = scmp.eq.s32.totalorder %s25, 0
      %p99 = por %p97, %p98
      %s101 = sadd.s32 %s100, 1
      %p104 = scmp.eq.s32.totalorder %s19, 1
      %p105 = scmp.ne.s32.totalorder %s100, %s102
      %p106 = scmp.eq.s32.totalorder %s19, 0
      %p107 = por %p105, %p106
      %p108 = scmp.ne.s32.totalorder %s100, %s102
      %p109 = scmp.eq.s32.totalorder %s24, 1
      %p110 = por %p108, %p109
      %p111 = scmp.ne.s32.totalorder %s102, %s103
      %p112 = scmp.eq.s32.totalorder %s24, 0
      %p113 = por %p111, %p112
      %p114 = scmp.ne.s32.totalorder %s102, %s103
      %p115 = scmp.eq.s32.totalorder %s25, 1
      %p116 = por %p114, %p115
      %p118 = scmp.ne.s32.totalorder %s103, %s117
      %p119 = scmp.eq.s32.totalorder %s25, 0
      %p120 = por %p118, %p119
      %s122 = sadd.s32 %s121, 1
      %p125 = scmp.eq.s32.totalorder %s19, 1
      %p126 = scmp.ne.s32.totalorder %s121, %s123
      %p127 = scmp.eq.s32.totalorder %s19, 0
      %p128 = por %p126, %p127
      %p129 = scmp.ne.s32.totalorder %s121, %s123
      %p130 = scmp.eq.s32.totalorder %s24, 1
      %p131 = por %p129, %p130
      %p132 = scmp.ne.s32.totalorder %s123, %s124
      %p133 = scmp.eq.s32.totalorder %s24, 0
      %p134 = por %p132, %p133
      %p135 = scmp.ne.s32.totalorder %s123, %s124
      %p136 = scmp.eq.s32.totalorder %s25, 1
      %p137 = por %p135, %p136
      %p139 = scmp.ne.s32.totalorder %s124, %s138
      %p140 = scmp.eq.s32.totalorder %s25, 0
      %p141 = por %p139, %p140
      %s143 = sadd.s32 %s142, 1
      %p146 = scmp.eq.s32.totalorder %s19, 1
      %p147 = scmp.ne.s32.totalorder %s142, %s144
      %p148 = scmp.eq.s32.totalorder %s19, 0
      %p149 = por %p147, %p148
      %p150 = scmp.ne.s32.totalorder %s142, %s144
      %p151 = scmp.eq.s32.totalorder %s24, 1
      %p152 = por %p150, %p151
      %p153 = scmp.ne.s32.totalorder %s144, %s145
      %p154 = scmp.eq.s32.totalorder %s24, 0
      %p155 = por %p153, %p154
      %p156 = scmp.ne.s32.totalorder %s144, %s145
      %p157 = scmp.eq.s32.totalorder %s25, 1
      %p158 = por %p156, %p157
      %p160 = scmp.ne.s32.totalorder %s145, %s159
      %p161 = scmp.eq.s32.totalorder %s25, 0
      %p162 = por %p160, %p161
      %s164 = sadd.s32 %s163, 1
      %p167 = scmp.eq.s32.totalorder %s19, 1
      %p168 = scmp.ne.s32.totalorder %s163, %s165
      %p169 = scmp.eq.s32.totalorder %s19, 0
      %p170 = por %p168, %p169
      %p171 = scmp.ne.s32.totalorder %s163, %s165
      %p172 = scmp.eq.s32.totalorder %s24, 1
      %p173 = por %p171, %p172
      %p174 = scmp.ne.s32.totalorder %s165, %s166
      %p175 = scmp.eq.s32.totalorder %s24, 0
      %p176 = por %p174, %p175
      %p177 = scmp.ne.s32.totalorder %s165, %s166
      %p178 = scmp.eq.s32.totalorder %s25, 1
      %p179 = por %p177, %p178
      %p181 = scmp.ne.s32.totalorder %s166, %s180
      %p182 = scmp.eq.s32.totalorder %s25, 0
      %p183 = por %p181, %p182
      %s185 = sadd.s32 %s184, 1
      %p188 = scmp.eq.s32.totalorder %s19, 1
      %p189 = scmp.ne.s32.totalorder %s184, %s186
      %p190 = scmp.eq.s32.totalorder %s19, 0
      %p191 = por %p189, %p190
      %p192 = scmp.ne.s32.totalorder %s184, %s186
      %p193 = scmp.eq.s32.totalorder %s24, 1
      %p194 = por %p192, %p193
      %p195 = scmp.ne.s32.totalorder %s186, %s187
      %p196 = scmp.eq.s32.totalorder %s24, 0
      %p197 = por %p195, %p196
      %p198 = scmp.ne.s32.totalorder %s186, %s187
      %p199 = scmp.eq.s32.totalorder %s25, 1
      %p200 = por %p198, %p199
      %p202 = scmp.ne.s32.totalorder %s187, %s201
      %p203 = scmp.eq.s32.totalorder %s25, 0
      %p204 = por %p202, %p203
      %s205 = ssub.s32 %s19, %s26
      %p206 = scmp.eq.s32.totalorder %s205, 0
      %s208 = sadd.s32 %s207, 1
      %s209 = scalar_select %p206, %s207, %s208
      %p212 = pneg %p206
      %p213 = scmp.eq.s32.totalorder %s19, 1
      %p214 = por %p212, %p213
      %p215 = scmp.ne.s32.totalorder %s207, %s210
      %p216 = scmp.eq.s32.totalorder %s19, 0
      %p217 = por %p215, %p216
      %p218 = scmp.ne.s32.totalorder %s207, %s210
      %p219 = scmp.eq.s32.totalorder %s24, 1
      %p220 = por %p218, %p219
      %p221 = scmp.ne.s32.totalorder %s210, %s211
      %p222 = scmp.eq.s32.totalorder %s24, 0
      %p223 = por %p221, %p222
      %p224 = scmp.ne.s32.totalorder %s210, %s211
      %p225 = scmp.eq.s32.totalorder %s25, 1
      %p226 = por %p224, %p225
      %p228 = scmp.ne.s32.totalorder %s211, %s227
      %p229 = scmp.eq.s32.totalorder %s25, 0
      %p230 = por %p228, %p229
      %p231 = scmp.le.s32.totalorder 1, %s19
      %p232 = scmp.lt.s32.totalorder %s19, 3
      %p233 = pnand %p231, %p232
      %p234 = pneg %p233
      // Predicated region
      $region9: #{tpu_custom_call.1} parent=5 // pred_check
        _
      $region10: #{tpu_custom_call.1} parent=5 // pred_check_branch
        %236 = sbr.rel (%p233) target = $region12
      $region11: #{tpu_custom_call.1} parent=5 // pred_region
        %s237 = ssub.s32 %s19, 1
        // Predicated region
        $region13: #{tpu_custom_call.1} parent=11 // pred_check
          %p238 = pneg %p92
        $region14: #{tpu_custom_call.1} parent=11 // pred_check_branch
          %240 = sbr.rel (%p238) target = $region16
        $region15: #{tpu_custom_call.1} parent=11 // pred_region
          _
        $region16: #{tpu_custom_call.1} parent=11 // pred_fallthru
          _
        // Predicated region
        $region17: #{tpu_custom_call.1} parent=11 // pred_check
          %p241 = pneg %p113
        $region18: #{tpu_custom_call.1} parent=11 // pred_check_branch
          %243 = sbr.rel (%p241) target = $region20
        $region19: #{tpu_custom_call.1} parent=11 // pred_region
          %245 = vsyncadd [#allocation4], 0
          %s246 = sshll.u32 %s3, 4
          %s247 = int_to_ptr.hbm [resolvable:$true] %s246
          %s248 = sshll.u32 [#allocation3], 4
          %s249 = int_to_ptr.vmem [resolvable:$true] %s248
          %254 = dma.hbm_to_vmem [thread:$0]  %s247, 256, %s249, [#allocation4], 64, 64, 4
        $region20: #{tpu_custom_call.1} parent=11 // pred_fallthru
          _
        // Predicated region
        $region21: #{tpu_custom_call.1} parent=11 // pred_check
          %p255 = pneg %p134
        $region22: #{tpu_custom_call.1} parent=11 // pred_check_branch
          %257 = sbr.rel (%p255) target = $region24
        $region23: #{tpu_custom_call.1} parent=11 // pred_region
          %259 = vsyncadd [#allocation7], 0
          %s260 = sshll.u32 %s4, 4
          %s261 = int_to_ptr.hbm [resolvable:$true] %s260
          %s262 = sshll.u32 [#allocation6], 4
          %s263 = int_to_ptr.vmem [resolvable:$true] %s262
          %268 = dma.hbm_to_vmem [thread:$0]  %s261, 256, %s263, [#allocation7], 64, 64, 4
        $region24: #{tpu_custom_call.1} parent=11 // pred_fallthru
          _
        // Predicated region
        $region25: #{tpu_custom_call.1} parent=11 // pred_check
          %p269 = pneg %p155
        $region26: #{tpu_custom_call.1} parent=11 // pred_check_branch
          %271 = sbr.rel (%p269) target = $region28
        $region27: #{tpu_custom_call.1} parent=11 // pred_region
          _
        $region28: #{tpu_custom_call.1} parent=11 // pred_fallthru
          _
        // Predicated region
        $region29: #{tpu_custom_call.1} parent=11 // pred_check
          %p272 = pneg %p176
        $region30: #{tpu_custom_call.1} parent=11 // pred_check_branch
          %274 = sbr.rel (%p272) target = $region32
        $region31: #{tpu_custom_call.1} parent=11 // pred_region
          _
        $region32: #{tpu_custom_call.1} parent=11 // pred_fallthru
          _
        // Predicated region
        $region33: #{tpu_custom_call.1} parent=11 // pred_check
          %p275 = pneg %p197
        $region34: #{tpu_custom_call.1} parent=11 // pred_check_branch
          %277 = sbr.rel (%p275) target = $region36
        $region35: #{tpu_custom_call.1} parent=11 // pred_region
          _
        $region36: #{tpu_custom_call.1} parent=11 // pred_fallthru
          _
      $region12: #{tpu_custom_call.1} parent=5 // pred_fallthru
        _
      %p278 = scmp.lt.s32.totalorder %s19, 2
      // Predicated region
      $region37: #{tpu_custom_call.1} parent=5 // pred_check
        %p279 = pneg %p278
      $region38: #{tpu_custom_call.1} parent=5 // pred_check_branch
        %281 = sbr.rel (%p279) target = $region40
      $region39: #{tpu_custom_call.1} parent=5 // pred_region
        // Predicated region
        $region41: #{tpu_custom_call.1} parent=39 // pred_check
          %p282 = pneg %p39
        $region42: #{tpu_custom_call.1} parent=39 // pred_check_branch
          %284 = sbr.rel (%p282) target = $region44
        $region43: #{tpu_custom_call.1} parent=39 // pred_region
          %p285 = scmp.lt.s32.totalorder %s19, 1
          %s286 = scalar_select %p285, %s19, 1
          %s287 = smul.addr %s286, 2
          %s288 = smul.addr %s287, 8
          %s289 = scalar_lea.vmem %s0, %s288
        $region44: #{tpu_custom_call.1} parent=39 // pred_fallthru
          _
        // Predicated region
        $region45: #{tpu_custom_call.1} parent=39 // pred_check
          %p290 = pneg %p65
        $region46: #{tpu_custom_call.1} parent=39 // pred_check_branch
          %292 = sbr.rel (%p290) target = $region48
        $region47: #{tpu_custom_call.1} parent=39 // pred_region
          %p293 = scmp.lt.s32.totalorder %s19, 1
          %s294 = scalar_select %p293, %s19, 1
          %s295 = smul.addr %s294, 3
          %s296 = smul.addr %s295, 4
          %s297 = scalar_lea.vmem %s1, %s296
        $region48: #{tpu_custom_call.1} parent=39 // pred_fallthru
          _
      $region40: #{tpu_custom_call.1} parent=5 // pred_fallthru
        _
      %p298 = scmp.le.s32.totalorder 1, %s19
      %p299 = scmp.lt.s32.totalorder %s19, 3
      %p300 = pnand %p298, %p299
      %p301 = pneg %p300
      // Predicated region
      $region49: #{tpu_custom_call.1} parent=5 // pred_check
        _
      $region50: #{tpu_custom_call.1} parent=5 // pred_check_branch
        %303 = sbr.rel (%p300) target = $region52
      $region51: #{tpu_custom_call.1} parent=5 // pred_region
        %s304 = ssub.s32 %s19, 1
        // Predicated region
        $region53: #{tpu_custom_call.1} parent=51 // pred_check
          %p305 = pneg %p113
        $region54: #{tpu_custom_call.1} parent=51 // pred_check_branch
          %307 = sbr.rel (%p305) target = $region56
        $region55: #{tpu_custom_call.1} parent=51 // pred_region
          %309 = dma.done [#allocation4], 256
        $region56: #{tpu_custom_call.1} parent=51 // pred_fallthru
          _
        // Predicated region
        $region57: #{tpu_custom_call.1} parent=51 // pred_check
          %p310 = pneg %p134
        $region58: #{tpu_custom_call.1} parent=51 // pred_check_branch
          %312 = sbr.rel (%p310) target = $region60
        $region59: #{tpu_custom_call.1} parent=51 // pred_region
          %314 = dma.done [#allocation7], 256
        $region60: #{tpu_custom_call.1} parent=51 // pred_fallthru
          _
        %p315 = scmp.lt.s32.totalorder %s24, 1
        %s316 = scalar_select %p315, %s24, 1
        %s317 = smul.addr %s316, 2
        %s318 = smul.addr %s317, 8
        %s319 = scalar_lea.vmem %s0, %s318
        %p320 = pneg %p45
        %p321 = pneg %p42
        %p322 = scmp.lt.s32.totalorder %s24, 1
        %s323 = scalar_select %p322, %s24, 1
        %s324 = smul.addr %s323, 3
        %s325 = smul.addr %s324, 4
        %s326 = scalar_lea.vmem %s1, %s325
        %p327 = pneg %p71
        %p328 = pneg %p68
        %p329 = pneg %p92
        %p330 = pneg %p89
        %p331 = pneg %p113
        %p332 = pneg %p110
        %p333 = pneg %p134
        %p334 = pneg %p131
        %p335 = pneg %p155
        %p336 = pneg %p152
        %p337 = pneg %p176
        %p338 = pneg %p173
        %p339 = pneg %p197
        %p340 = pneg %p194
        %p341 = pneg %p223
        %p342 = pneg %p220
        %s343 = sand.u32 %s210, 1
        %s344 = scalar_lea.sflag [#allocation5], %s343
        %s345 = sand.u32 %s210, 1
        %s346 = smul.addr %s345, 16
        %s347 = scalar_lea.vmem [#allocation8], %s346
        %p348 = scmp.lt.s32.totalorder %s24, 1
        %s349 = scalar_select %p348, %s24, 1
        %s350 = smul.addr %s349, 2
        %s351 = smul.addr %s350, 8
        %s352 = scalar_lea.vmem %s0, %s351
        %p353 = scmp.lt.s32.totalorder %s24, 1
        %s354 = scalar_select %p353, %s24, 1
        %s355 = smul.addr %s354, 3
        %s356 = smul.addr %s355, 4
        %s357 = scalar_lea.vmem %s1, %s356
        %v359 = vld [vmem:[%s352] sm:$0xff]
        %v360 = vld [vmem:[%s352 + $0x8] sm:$0xff]
        %v361 = vld [vmem:[%s357] sm:$0xf]
        %v362 = vld [vmem:[%s357 + $0x4] sm:$0xf]
        %v363 = vld [vmem:[%s357 + $0x8] sm:$0xf]
        %v364 = vld [vmem:[%s2] sm:$0xff]
        %v365 = vld [vmem:[%s2 + $0x8] sm:$0xff]
        %v366 = vld [vmem:[%s2 + $0x10] sm:$0xff]
        %v367 = vld [vmem:[%s2 + $0x18] sm:$0xff]
        %vm368 = vcmask 261120
        %v370 = vsel %vm368, %v359, 0
        %v373 = vsel %vm368, %v360, 0
        %375 = vmatpush.msra.mxu0 0.0
        %376 = vmatpush.msra.mxu0 0.0
        %377 = vmatpush.msra.mxu0 0.0
        %378 = vmatpush.msra.mxu0 0.0
        %379 = vmatpush.msra.mxu0 0.0
        %380 = vmatpush.msra.mxu0 0.0
        %381 = vmatpush.msra.mxu0 0.0
        %382 = vmatpush.msra.mxu0 0.0
        %383 = vmatpush.msra.mxu0 0.0
        %384 = vmatpush.msra.mxu0 0.0
        %385 = vmatpush.msra.mxu0 0.0
        %386 = vmatpush.msra.mxu0 0.0
        %v387 = vand.u32 %v367, 4294901760
        %388 = vmatpush.msra.mxu0 %v387
        %v389 = vand.u32 %v366, 4294901760
        %390 = vmatpush.msra.mxu0 %v389
        %v391 = vand.u32 %v365, 4294901760
        %392 = vmatpush.msra.mxu0 %v391
        %v393 = vand.u32 %v364, 4294901760
        %394 = vmatpush.msra.mxu0 %v393
        %v395 = vand.u32 %v370, 4294901760
        %v396 = vsub.f32 %v370, %v395
        %v397 = vand.u32 %v396, 4294901760
        %v398 = vsub.f32 %v396, %v397
        %v399 = vand.u32 %v398, 4294901760
        %400 = vmatmul.f32.gmra.mxu0 %v399
        %v401 = vpop.f32.mrf.mxu0
        %v402 = vadd.f32 0.0, %v401
        %v403 = vand.u32 %v373, 4294901760
        %v404 = vsub.f32 %v373, %v403
        %v405 = vand.u32 %v404, 4294901760
        %v406 = vsub.f32 %v404, %v405
        %v407 = vand.u32 %v406, 4294901760
        %408 = vmatmul.f32.gmra.mxu0 %v407
        %v409 = vpop.f32.mrf.mxu0
        %v410 = vadd.f32 0.0, %v409
        %411 = vdwg.mxu0
        %412 = vmatpush.msra.mxu0 0.0
        %413 = vmatpush.msra.mxu0 0.0
        %414 = vmatpush.msra.mxu0 0.0
        %415 = vmatpush.msra.mxu0 0.0
        %416 = vmatpush.msra.mxu0 0.0
        %417 = vmatpush.msra.mxu0 0.0
        %418 = vmatpush.msra.mxu0 0.0
        %419 = vmatpush.msra.mxu0 0.0
        %420 = vmatpush.msra.mxu0 0.0
        %421 = vmatpush.msra.mxu0 0.0
        %422 = vmatpush.msra.mxu0 0.0
        %423 = vmatpush.msra.mxu0 0.0
        %v424 = vand.u32 %v367, 4294901760
        %v425 = vsub.f32 %v367, %v424
        %v426 = vand.u32 %v425, 4294901760
        %v427 = vsub.f32 %v425, %v426
        %v428 = vand.u32 %v427, 4294901760
        %429 = vmatpush.msra.mxu0 %v428
        %v430 = vand.u32 %v366, 4294901760
        %v431 = vsub.f32 %v366, %v430
        %v432 = vand.u32 %v431, 4294901760
        %v433 = vsub.f32 %v431, %v432
        %v434 = vand.u32 %v433, 4294901760
        %435 = vmatpush.msra.mxu0 %v434
        %v436 = vand.u32 %v365, 4294901760
        %v437 = vsub.f32 %v365, %v436
        %v438 = vand.u32 %v437, 4294901760
        %v439 = vsub.f32 %v437, %v438
        %v440 = vand.u32 %v439, 4294901760
        %441 = vmatpush.msra.mxu0 %v440
        %v442 = vand.u32 %v364, 4294901760
        %v443 = vsub.f32 %v364, %v442
        %v444 = vand.u32 %v443, 4294901760
        %v445 = vsub.f32 %v443, %v444
        %v446 = vand.u32 %v445, 4294901760
        %447 = vmatpush.msra.mxu0 %v446
        %v448 = vand.u32 %v370, 4294901760
        %449 = vmatmul.f32.gmra.mxu0 %v448
        %v450 = vpop.f32.mrf.mxu0
        %v451 = vadd.f32 %v402, %v450
        %v452 = vand.u32 %v373, 4294901760
        %453 = vmatmul.f32.gmra.mxu0 %v452
        %v454 = vpop.f32.mrf.mxu0
        %v455 = vadd.f32 %v410, %v454
        %456 = vdwg.mxu0
        %457 = vmatpush.msra.mxu0 0.0
        %458 = vmatpush.msra.mxu0 0.0
        %459 = vmatpush.msra.mxu0 0.0
        %460 = vmatpush.msra.mxu0 0.0
        %461 = vmatpush.msra.mxu0 0.0
        %462 = vmatpush.msra.mxu0 0.0
        %463 = vmatpush.msra.mxu0 0.0
        %464 = vmatpush.msra.mxu0 0.0
        %465 = vmatpush.msra.mxu0 0.0
        %466 = vmatpush.msra.mxu0 0.0
        %467 = vmatpush.msra.mxu0 0.0
        %468 = vmatpush.msra.mxu0 0.0
        %v469 = vand.u32 %v367, 4294901760
        %v470 = vsub.f32 %v367, %v469
        %471 = vmatpush.msra.mxu0 %v470
        %v472 = vand.u32 %v366, 4294901760
        %v473 = vsub.f32 %v366, %v472
        %474 = vmatpush.msra.mxu0 %v473
        %v475 = vand.u32 %v365, 4294901760
        %v476 = vsub.f32 %v365, %v475
        %477 = vmatpush.msra.mxu0 %v476
        %v478 = vand.u32 %v364, 4294901760
        %v479 = vsub.f32 %v364, %v478
        %480 = vmatpush.msra.mxu0 %v479
        %v481 = vand.u32 %v370, 4294901760
        %v482 = vsub.f32 %v370, %v481
        %483 = vmatmul.f32.gmra.mxu0 %v482
        %v484 = vpop.f32.mrf.mxu0
        %v485 = vadd.f32 %v451, %v484
        %v486 = vand.u32 %v373, 4294901760
        %v487 = vsub.f32 %v373, %v486
        %488 = vmatmul.f32.gmra.mxu0 %v487
        %v489 = vpop.f32.mrf.mxu0
        %v490 = vadd.f32 %v455, %v489
        %491 = vdwg.mxu0
        %492 = vmatpush.msra.mxu0 0.0
        %493 = vmatpush.msra.mxu0 0.0
        %494 = vmatpush.msra.mxu0 0.0
        %495 = vmatpush.msra.mxu0 0.0
        %496 = vmatpush.msra.mxu0 0.0
        %497 = vmatpush.msra.mxu0 0.0
        %498 = vmatpush.msra.mxu0 0.0
        %499 = vmatpush.msra.mxu0 0.0
        %500 = vmatpush.msra.mxu0 0.0
        %501 = vmatpush.msra.mxu0 0.0
        %502 = vmatpush.msra.mxu0 0.0
        %503 = vmatpush.msra.mxu0 0.0
        %v504 = vand.u32 %v367, 4294901760
        %505 = vmatpush.msra.mxu0 %v504
        %v506 = vand.u32 %v366, 4294901760
        %507 = vmatpush.msra.mxu0 %v506
        %v508 = vand.u32 %v365, 4294901760
        %509 = vmatpush.msra.mxu0 %v508
        %v510 = vand.u32 %v364, 4294901760
        %511 = vmatpush.msra.mxu0 %v510
        %v512 = vand.u32 %v370, 4294901760
        %v513 = vsub.f32 %v370, %v512
        %v514 = vand.u32 %v513, 4294901760
        %515 = vmatmul.f32.gmra.mxu0 %v514
        %v516 = vpop.f32.mrf.mxu0
        %v517 = vadd.f32 %v485, %v516
        %v518 = vand.u32 %v373, 4294901760
        %v519 = vsub.f32 %v373, %v518
        %v520 = vand.u32 %v519, 4294901760
        %521 = vmatmul.f32.gmra.mxu0 %v520
        %v522 = vpop.f32.mrf.mxu0
        %v523 = vadd.f32 %v490, %v522
        %524 = vdwg.mxu0
        %525 = vmatpush.msra.mxu0 0.0
        %526 = vmatpush.msra.mxu0 0.0
        %527 = vmatpush.msra.mxu0 0.0
        %528 = vmatpush.msra.mxu0 0.0
        %529 = vmatpush.msra.mxu0 0.0
        %530 = vmatpush.msra.mxu0 0.0
        %531 = vmatpush.msra.mxu0 0.0
        %532 = vmatpush.msra.mxu0 0.0
        %533 = vmatpush.msra.mxu0 0.0
        %534 = vmatpush.msra.mxu0 0.0
        %535 = vmatpush.msra.mxu0 0.0
        %536 = vmatpush.msra.mxu0 0.0
        %v537 = vand.u32 %v367, 4294901760
        %v538 = vsub.f32 %v367, %v537
        %v539 = vand.u32 %v538, 4294901760
        %540 = vmatpush.msra.mxu0 %v539
        %v541 = vand.u32 %v366, 4294901760
        %v542 = vsub.f32 %v366, %v541
        %v543 = vand.u32 %v542, 4294901760
        %544 = vmatpush.msra.mxu0 %v543
        %v545 = vand.u32 %v365, 4294901760
        %v546 = vsub.f32 %v365, %v545
        %v547 = vand.u32 %v546, 4294901760
        %548 = vmatpush.msra.mxu0 %v547
        %v549 = vand.u32 %v364, 4294901760
        %v550 = vsub.f32 %v364, %v549
        %v551 = vand.u32 %v550, 4294901760
        %552 = vmatpush.msra.mxu0 %v551
        %v553 = vand.u32 %v370, 4294901760
        %554 = vmatmul.f32.gmra.mxu0 %v553
        %v555 = vpop.f32.mrf.mxu0
        %v556 = vadd.f32 %v517, %v555
        %v557 = vand.u32 %v373, 4294901760
        %558 = vmatmul.f32.gmra.mxu0 %v557
        %v559 = vpop.f32.mrf.mxu0
        %v560 = vadd.f32 %v523, %v559
        %561 = vdwg.mxu0
        %562 = vmatpush.msra.mxu0 0.0
        %563 = vmatpush.msra.mxu0 0.0
        %564 = vmatpush.msra.mxu0 0.0
        %565 = vmatpush.msra.mxu0 0.0
        %566 = vmatpush.msra.mxu0 0.0
        %567 = vmatpush.msra.mxu0 0.0
        %568 = vmatpush.msra.mxu0 0.0
        %569 = vmatpush.msra.mxu0 0.0
        %570 = vmatpush.msra.mxu0 0.0
        %571 = vmatpush.msra.mxu0 0.0
        %572 = vmatpush.msra.mxu0 0.0
        %573 = vmatpush.msra.mxu0 0.0
        %v574 = vand.u32 %v367, 4294901760
        %575 = vmatpush.msra.mxu0 %v574
        %v576 = vand.u32 %v366, 4294901760
        %577 = vmatpush.msra.mxu0 %v576
        %v578 = vand.u32 %v365, 4294901760
        %579 = vmatpush.msra.mxu0 %v578
        %v580 = vand.u32 %v364, 4294901760
        %581 = vmatpush.msra.mxu0 %v580
        %v582 = vand.u32 %v370, 4294901760
        %583 = vmatmul.f32.gmra.mxu0 %v582
        %v584 = vpop.f32.mrf.mxu0
        %v585 = vadd.f32 %v556, %v584
        %v586 = vand.u32 %v373, 4294901760
        %587 = vmatmul.f32.gmra.mxu0 %v586
        %v588 = vpop.f32.mrf.mxu0
        %v589 = vadd.f32 %v560, %v588
        %590 = vdwg.mxu0
        %v591 = vld [vmem:[%s6] sm:$0x1]
        %v592 = vperm.slane %v591, 0
        %v593 = vadd.f32 %v585, %v592
        %v594 = vadd.f32 %v589, %v592
        %v595 = vld [vmem:[#allocation3] sm:$0xf]
        %v596 = vld [vmem:[#allocation3 + $0x4] sm:$0xf]
        %v597 = vld [vmem:[#allocation3 + $0x8] sm:$0xf]
        %v598 = vld [vmem:[#allocation3 + $0xc] sm:$0xf]
        %v599 = vld [vmem:[%s7] sm:$0x1]
        %v600 = vperm.slane %v599, 0
        %v604 = vunpack.c.l.b16 %v361
        %v605 = vunpack.c.l.b16 %v362
        %v606 = vunpack.c.l.b16 %v363
        %v607 = vpack.c.b16 %v605, %v604
        %v608 = vpack.c.b16 %v606, %v606
        %v613 = vunpack.c.l.b16 %v595
        %v614 = vunpack.c.l.b16 %v596
        %v615 = vunpack.c.l.b16 %v597
        %v616 = vunpack.c.l.b16 %v598
        %v617 = vpack.c.b16 %v614, %v613
        %v618 = vpack.c.b16 %v616, %v615
        %v622 = vsel %vm368, %v607, 0
        %v625 = vsel %vm368, %v608, 0
        %627 = vmatpush.bf16.msra.mxu0 0
        %628 = vmatpush.bf16.msra.mxu0 0
        %629 = vmatpush.bf16.msra.mxu0 0
        %630 = vmatpush.bf16.msra.mxu0 0
        %631 = vmatpush.bf16.msra.mxu0 0
        %632 = vmatpush.bf16.msra.mxu0 0
        %633 = vmatpush.bf16.msra.mxu0 %v618
        %634 = vmatpush.bf16.msra.mxu0 %v617
        %635 = vmatmul.bf16.gmra.mxu0 %v622
        %v636 = vpop.f32.mrf.mxu0
        %v637 = vadd.f32 %v600, %v636
        %v638 = vpop.f32.mrf.mxu0
        %v639 = vadd.f32 %v600, %v638
        %640 = vmatmul.bf16.gmra.mxu0 %v625
        %v641 = vpop.f32.mrf.mxu0
        %v642 = vadd.f32 %v600, %v641
        %v643 = vpop.f32.mrf.mxu0
        %644 = vdwg.mxu0
        %v645 = vpack.c.bf16 %v637, %v637
        %v646 = vpack.c.bf16 %v639, %v639
        %v647 = vpack.c.bf16 %v642, %v642
        %v648 = vmul.f32 %v593, 0.35355338
        %v649 = vmul.f32 %v594, 0.35355338
        %v650 = vpack.c.bf16 %v648, %v648
        %v651 = vpack.c.bf16 %v649, %v649
        %v654 = vunpack.c.l.b16 %v650
        %v655 = vunpack.c.l.b16 %v651
        %v656 = vpack.c.b16 %v655, %v654
        %v660 = vunpack.c.l.b16 %v645
        %v661 = vunpack.c.l.b16 %v646
        %v662 = vunpack.c.l.b16 %v647
        %v663 = vpack.c.b16 %v661, %v660
        %v664 = vpack.c.b16 %v662, %v662
        %vm665 = vcmask 64512
        %v667 = vsel %vm665, %v656, 0
        %v670 = vsel %vm665, %v663, 0
        %v673 = vsel %vm665, %v664, 0
        %675 = vmatpush.bf16.xpose.msra.mxu0 0
        %676 = vmatpush.bf16.xpose.msra.mxu0 0
        %677 = vmatpush.bf16.xpose.msra.mxu0 0
        %678 = vmatpush.bf16.xpose.msra.mxu0 0
        %679 = vmatpush.bf16.xpose.msra.mxu0 0
        %680 = vmatpush.bf16.xpose.msra.mxu0 0
        %681 = vmatpush.bf16.xpose.msra.mxu0 %v673
        %682 = vmatpush.bf16.xpose.msra.mxu0 %v670
        %683 = vmatmul.bf16.gmra.mxu0 %v667
        %v684 = vpop.f32.mrf.mxu0
        %v685 = vadd.f32 0.0, %v684
        %v686 = vpop.f32.mrf.mxu0
        %v687 = vadd.f32 0.0, %v686
        %688 = vdwg.mxu0
        %vm689 = vcmask 195584
        %v690 = vsel %vm689, %v685, -inf
        %691 = vmax.xlane.f32.xlu0 %v690
        %v692 = vpop.xlane.xlu0 %691
        %v693 = vsel %vm689, %v687, -inf
        %694 = vmax.xlane.f32.xlu0 %v693
        %v695 = vpop.xlane.xlu0 %694
        %v696 = vsub.f32 %v685, %v692
        %v697 = vsub.f32 %v687, %v695
        %v698 = vmul.f32 %v696, 1.442695
        %v699 = vpow.pop %v698
        %v700 = vmul.f32 %v697, 1.442695
        %v701 = vpow.pop %v700
        %v702 = vsel %vm689, %v699, 0.0
        %703 = vadd.xlane.f32.xlu0 %v702
        %v704 = vpop.xlane.xlu0 %703
        %v705 = vsel %vm689, %v701, 0.0
        %706 = vadd.xlane.f32.xlu0 %v705
        %v707 = vpop.xlane.xlu0 %706
        %v708 = vrcp.pop %v704
        %v709 = vrcp.pop %v707
        %v710 = vmul.f32 %v699, %v708
        %v711 = vmul.f32 %v701, %v709
        %v712 = vpack.c.bf16 %v711, %v710
        %713 = vrot.lane.b32.xlu0 %v663, 96
        %v714 = vpop.permute.xlu0 %713
        %715 = vrot.lane.b32.xlu0 %v664, 96
        %v716 = vpop.permute.xlu0 %715
        %v719 = vsel %vm689, %v712, 0
        %vm721 = vcmask 1043456
        %v723 = vsel %vm721, %v716, 0
        %725 = vmatpush.bf16.msra.mxu0 0
        %726 = vmatpush.bf16.msra.mxu0 0
        %727 = vmatpush.bf16.msra.mxu0 0
        %728 = vmatpush.bf16.msra.mxu0 0
        %729 = vmatpush.bf16.msra.mxu0 0
        %730 = vmatpush.bf16.msra.mxu0 0
        %731 = vmatpush.bf16.msra.mxu0 %v723
        %732 = vmatpush.bf16.msra.mxu0 %v714
        %733 = vmatmul.bf16.gmra.mxu0 %v719
        %v734 = vpop.f32.mrf.mxu0
        %v735 = vadd.f32 0.0, %v734
        %v736 = vpop.f32.mrf.mxu0
        %v737 = vadd.f32 0.0, %v736
        %738 = vdwg.mxu0
        %v739 = vpack.c.bf16 %v735, %v735
        %v740 = vpack.c.bf16 %v737, %v737
        %vm741 = vcmask 60416
        %742 = vst.msk [vmem:[#allocation2] sm:$0xf] %vm741, %v739
        %743 = vst.msk [vmem:[#allocation2 + $0x4] sm:$0xf] %vm741, %v740
        %744 = vrot.lane.b32.xlu0 %v656, 120
        %v745 = vpop.permute.xlu0 %744
        %746 = vrot.lane.b32.xlu0 %v663, 120
        %v747 = vpop.permute.xlu0 %746
        %748 = vrot.lane.b32.xlu0 %v664, 120
        %v749 = vpop.permute.xlu0 %748
        %v751 = vsel %vm665, %v745, 0
        %v754 = vsel %vm665, %v747, 0
        %v757 = vsel %vm665, %v749, 0
        %759 = vmatpush.bf16.xpose.msra.mxu0 0
        %760 = vmatpush.bf16.xpose.msra.mxu0 0
        %761 = vmatpush.bf16.xpose.msra.mxu0 0
        %762 = vmatpush.bf16.xpose.msra.mxu0 0
        %763 = vmatpush.bf16.xpose.msra.mxu0 0
        %764 = vmatpush.bf16.xpose.msra.mxu0 0
        %765 = vmatpush.bf16.xpose.msra.mxu0 %v757
        %766 = vmatpush.bf16.xpose.msra.mxu0 %v754
        %767 = vmatmul.bf16.gmra.mxu0 %v751
        %v768 = vpop.f32.mrf.mxu0
        %v769 = vadd.f32 0.0, %v768
        %v770 = vpop.f32.mrf.mxu0
        %v771 = vadd.f32 0.0, %v770
        %772 = vdwg.mxu0
        %v773 = vsel %vm689, %v769, -inf
        %774 = vmax.xlane.f32.xlu0 %v773
        %v775 = vpop.xlane.xlu0 %774
        %v776 = vsel %vm689, %v771, -inf
        %777 = vmax.xlane.f32.xlu0 %v776
        %v778 = vpop.xlane.xlu0 %777
        %v779 = vsub.f32 %v769, %v775
        %v780 = vsub.f32 %v771, %v778
        %v781 = vmul.f32 %v779, 1.442695
        %v782 = vpow.pop %v781
        %v783 = vmul.f32 %v780, 1.442695
        %v784 = vpow.pop %v783
        %v785 = vsel %vm689, %v782, 0.0
        %786 = vadd.xlane.f32.xlu0 %v785
        %v787 = vpop.xlane.xlu0 %786
        %v788 = vsel %vm689, %v784, 0.0
        %789 = vadd.xlane.f32.xlu0 %v788
        %v790 = vpop.xlane.xlu0 %789
        %v791 = vrcp.pop %v787
        %v792 = vrcp.pop %v790
        %v793 = vmul.f32 %v782, %v791
        %v794 = vmul.f32 %v784, %v792
        %v795 = vpack.c.bf16 %v794, %v793
        %796 = vrot.lane.b32.xlu0 %v663, 88
        %v797 = vpop.permute.xlu0 %796
        %798 = vrot.lane.b32.xlu0 %v664, 88
        %v799 = vpop.permute.xlu0 %798
        %v802 = vsel %vm689, %v795, 0
        %v805 = vsel %vm721, %v799, 0
        %807 = vmatpush.bf16.msra.mxu0 0
        %808 = vmatpush.bf16.msra.mxu0 0
        %809 = vmatpush.bf16.msra.mxu0 0
        %810 = vmatpush.bf16.msra.mxu0 0
        %811 = vmatpush.bf16.msra.mxu0 0
        %812 = vmatpush.bf16.msra.mxu0 0
        %813 = vmatpush.bf16.msra.mxu0 %v805
        %814 = vmatpush.bf16.msra.mxu0 %v797
        %815 = vmatmul.bf16.gmra.mxu0 %v802
        %v816 = vpop.f32.mrf.mxu0
        %v817 = vadd.f32 0.0, %v816
        %v818 = vpop.f32.mrf.mxu0
        %v819 = vadd.f32 0.0, %v818
        %820 = vdwg.mxu0
        %v821 = vpack.c.bf16 %v817, %v817
        %v822 = vpack.c.bf16 %v819, %v819
        %825 = vrot.lane.b32.xlu0 %v821, 8
        %v826 = vpop.permute.xlu0 %825
        %827 = vrot.lane.b32.xlu0 %v822, 8
        %v828 = vpop.permute.xlu0 %827
        %vm831 = vcmask 126016
        %832 = vst.msk [vmem:[#allocation2] sm:$0xf] %vm831, %v826
        %833 = vst.msk [vmem:[#allocation2 + $0x4] sm:$0xf] %vm831, %v828
        %834 = vrot.lane.b32.xlu0 %v656, 112
        %v835 = vpop.permute.xlu0 %834
        %836 = vrot.lane.b32.xlu0 %v663, 112
        %v837 = vpop.permute.xlu0 %836
        %838 = vrot.lane.b32.xlu0 %v664, 112
        %v839 = vpop.permute.xlu0 %838
        %v841 = vsel %vm665, %v835, 0
        %v844 = vsel %vm665, %v837, 0
        %v847 = vsel %vm665, %v839, 0
        %849 = vmatpush.bf16.xpose.msra.mxu0 0
        %850 = vmatpush.bf16.xpose.msra.mxu0 0
        %851 = vmatpush.bf16.xpose.msra.mxu0 0
        %852 = vmatpush.bf16.xpose.msra.mxu0 0
        %853 = vmatpush.bf16.xpose.msra.mxu0 0
        %854 = vmatpush.bf16.xpose.msra.mxu0 0
        %855 = vmatpush.bf16.xpose.msra.mxu0 %v847
        %856 = vmatpush.bf16.xpose.msra.mxu0 %v844
        %857 = vmatmul.bf16.gmra.mxu0 %v841
        %v858 = vpop.f32.mrf.mxu0
        %v859 = vadd.f32 0.0, %v858
        %v860 = vpop.f32.mrf.mxu0
        %v861 = vadd.f32 0.0, %v860
        %862 = vdwg.mxu0
        %v863 = vsel %vm689, %v859, -inf
        %864 = vmax.xlane.f32.xlu0 %v863
        %v865 = vpop.xlane.xlu0 %864
        %v866 = vsel %vm689, %v861, -inf
        %867 = vmax.xlane.f32.xlu0 %v866
        %v868 = vpop.xlane.xlu0 %867
        %v869 = vsub.f32 %v859, %v865
        %v870 = vsub.f32 %v861, %v868
        %v871 = vmul.f32 %v869, 1.442695
        %v872 = vpow.pop %v871
        %v873 = vmul.f32 %v870, 1.442695
        %v874 = vpow.pop %v873
        %v875 = vsel %vm689, %v872, 0.0
        %876 = vadd.xlane.f32.xlu0 %v875
        %v877 = vpop.xlane.xlu0 %876
        %v878 = vsel %vm689, %v874, 0.0
        %879 = vadd.xlane.f32.xlu0 %v878
        %v880 = vpop.xlane.xlu0 %879
        %v881 = vrcp.pop %v877
        %v882 = vrcp.pop %v880
        %v883 = vmul.f32 %v872, %v881
        %v884 = vmul.f32 %v874, %v882
        %v885 = vpack.c.bf16 %v884, %v883
        %886 = vrot.lane.b32.xlu0 %v663, 80
        %v887 = vpop.permute.xlu0 %886
        %888 = vrot.lane.b32.xlu0 %v664, 80
        %v889 = vpop.permute.xlu0 %888
        %v892 = vsel %vm689, %v885, 0
        %v895 = vsel %vm721, %v889, 0
        %897 = vmatpush.bf16.msra.mxu0 0
        %898 = vmatpush.bf16.msra.mxu0 0
        %899 = vmatpush.bf16.msra.mxu0 0
        %900 = vmatpush.bf16.msra.mxu0 0
        %901 = vmatpush.bf16.msra.mxu0 0
        %902 = vmatpush.bf16.msra.mxu0 0
        %903 = vmatpush.bf16.msra.mxu0 %v895
        %904 = vmatpush.bf16.msra.mxu0 %v887
        %905 = vmatmul.bf16.gmra.mxu0 %v892
        %v906 = vpop.f32.mrf.mxu0
        %v907 = vadd.f32 0.0, %v906
        %v908 = vpop.f32.mrf.mxu0
        %v909 = vadd.f32 0.0, %v908
        %910 = vdwg.mxu0
        %v911 = vpack.c.bf16 %v907, %v907
        %v912 = vpack.c.bf16 %v909, %v909
        %915 = vrot.lane.b32.xlu0 %v911, 16
        %v916 = vpop.permute.xlu0 %915
        %917 = vrot.lane.b32.xlu0 %v912, 16
        %v918 = vpop.permute.xlu0 %917
        %vm921 = vcmask 191616
        %922 = vst.msk [vmem:[#allocation2] sm:$0xf] %vm921, %v916
        %923 = vst.msk [vmem:[#allocation2 + $0x4] sm:$0xf] %vm921, %v918
        %924 = vrot.lane.b32.xlu0 %v656, 104
        %v925 = vpop.permute.xlu0 %924
        %926 = vrot.lane.b32.xlu0 %v663, 104
        %v927 = vpop.permute.xlu0 %926
        %928 = vrot.lane.b32.xlu0 %v664, 104
        %v929 = vpop.permute.xlu0 %928
        %v931 = vsel %vm665, %v925, 0
        %v934 = vsel %vm665, %v927, 0
        %v937 = vsel %vm665, %v929, 0
        %939 = vmatpush.bf16.xpose.msra.mxu0 0
        %940 = vmatpush.bf16.xpose.msra.mxu0 0
        %941 = vmatpush.bf16.xpose.msra.mxu0 0
        %942 = vmatpush.bf16.xpose.msra.mxu0 0
        %943 = vmatpush.bf16.xpose.msra.mxu0 0
        %944 = vmatpush.bf16.xpose.msra.mxu0 0
        %945 = vmatpush.bf16.xpose.msra.mxu0 %v937
        %946 = vmatpush.bf16.xpose.msra.mxu0 %v934
        %947 = vmatmul.bf16.gmra.mxu0 %v931
        %v948 = vpop.f32.mrf.mxu0
        %v949 = vadd.f32 0.0, %v948
        %v950 = vpop.f32.mrf.mxu0
        %v951 = vadd.f32 0.0, %v950
        %952 = vdwg.mxu0
        %v953 = vsel %vm689, %v949, -inf
        %954 = vmax.xlane.f32.xlu0 %v953
        %v955 = vpop.xlane.xlu0 %954
        %v956 = vsel %vm689, %v951, -inf
        %957 = vmax.xlane.f32.xlu0 %v956
        %v958 = vpop.xlane.xlu0 %957
        %v959 = vsub.f32 %v949, %v955
        %v960 = vsub.f32 %v951, %v958
        %v961 = vmul.f32 %v959, 1.442695
        %v962 = vpow.pop %v961
        %v963 = vmul.f32 %v960, 1.442695
        %v964 = vpow.pop %v963
        %v965 = vsel %vm689, %v962, 0.0
        %966 = vadd.xlane.f32.xlu0 %v965
        %v967 = vpop.xlane.xlu0 %966
        %v968 = vsel %vm689, %v964, 0.0
        %969 = vadd.xlane.f32.xlu0 %v968
        %v970 = vpop.xlane.xlu0 %969
        %v971 = vrcp.pop %v967
        %v972 = vrcp.pop %v970
        %v973 = vmul.f32 %v962, %v971
        %v974 = vmul.f32 %v964, %v972
        %v975 = vpack.c.bf16 %v974, %v973
        %976 = vrot.lane.b32.xlu0 %v663, 72
        %v977 = vpop.permute.xlu0 %976
        %978 = vrot.lane.b32.xlu0 %v664, 72
        %v979 = vpop.permute.xlu0 %978
        %v982 = vsel %vm689, %v975, 0
        %v985 = vsel %vm721, %v979, 0
        %987 = vmatpush.bf16.msra.mxu0 0
        %988 = vmatpush.bf16.msra.mxu0 0
        %989 = vmatpush.bf16.msra.mxu0 0
        %990 = vmatpush.bf16.msra.mxu0 0
        %991 = vmatpush.bf16.msra.mxu0 0
        %992 = vmatpush.bf16.msra.mxu0 0
        %993 = vmatpush.bf16.msra.mxu0 %v985
        %994 = vmatpush.bf16.msra.mxu0 %v977
        %995 = vmatmul.bf16.gmra.mxu0 %v982
        %v996 = vpop.f32.mrf.mxu0
        %v997 = vadd.f32 0.0, %v996
        %v998 = vpop.f32.mrf.mxu0
        %v999 = vadd.f32 0.0, %v998
        %1000 = vdwg.mxu0
        %v1001 = vpack.c.bf16 %v997, %v997
        %v1002 = vpack.c.bf16 %v999, %v999
        %1005 = vrot.lane.b32.xlu0 %v1001, 24
        %v1006 = vpop.permute.xlu0 %1005
        %1007 = vrot.lane.b32.xlu0 %v1002, 24
        %v1008 = vpop.permute.xlu0 %1007
        %vm1011 = vcmask 257216
        %1012 = vst.msk [vmem:[#allocation2] sm:$0xf] %vm1011, %v1006
        %1013 = vst.msk [vmem:[#allocation2 + $0x4] sm:$0xf] %vm1011, %v1008
        %v1014 = vld [vmem:[#allocation2] sm:$0xf]
        %v1015 = vld [vmem:[#allocation2 + $0x4] sm:$0xf]
        %v1016 = vld [vmem:[#allocation6] sm:$0xf]
        %v1017 = vld [vmem:[#allocation6 + $0x4] sm:$0xf]
        %v1018 = vld [vmem:[#allocation6 + $0x8] sm:$0xf]
        %v1019 = vld [vmem:[#allocation6 + $0xc] sm:$0xf]
        %v1022 = vunpack.c.l.b16 %v1014
        %v1023 = vunpack.c.l.b16 %v1015
        %v1024 = vpack.c.b16 %v1023, %v1022
        %v1029 = vunpack.c.l.b16 %v1016
        %v1030 = vunpack.c.l.b16 %v1017
        %v1031 = vunpack.c.l.b16 %v1018
        %v1032 = vunpack.c.l.b16 %v1019
        %v1033 = vpack.c.b16 %v1030, %v1029
        %v1034 = vpack.c.b16 %v1032, %v1031
        %v1038 = vsel %vm368, %v1024, 0
        %1040 = vmatpush.bf16.msra.mxu0 0
        %1041 = vmatpush.bf16.msra.mxu0 0
        %1042 = vmatpush.bf16.msra.mxu0 0
        %1043 = vmatpush.bf16.msra.mxu0 0
        %1044 = vmatpush.bf16.msra.mxu0 0
        %1045 = vmatpush.bf16.msra.mxu0 0
        %1046 = vmatpush.bf16.msra.mxu0 %v1034
        %1047 = vmatpush.bf16.msra.mxu0 %v1033
        %1048 = vmatmul.bf16.gmra.mxu0 %v1038
        %v1049 = vpop.f32.mrf.mxu0
        %v1050 = vadd.f32 0.0, %v1049
        %v1051 = vpop.f32.mrf.mxu0
        %v1052 = vadd.f32 0.0, %v1051
        %1053 = vdwg.mxu0
        %1056 = vrot.lane.b32.xlu0 %v1050, 32
        %v1057 = vpop.permute.xlu0 %1056
        %1058 = vrot.lane.b32.xlu0 %v1052, 32
        %v1059 = vpop.permute.xlu0 %1058
        %v1062 = vadd.f32 %v585, %v1057
        %v1063 = vadd.f32 %v589, %v1059
        %v1064 = vld [vmem:[%s7 + $0x1] sm:$0x1]
        %v1065 = vperm.slane %v1064, 0
        %1067 = vrot.lane.b32.xlu0 %v1065, 32
        %v1068 = vpop.permute.xlu0 %1067
        %v1070 = vadd.f32 %v1062, %v1068
        %v1071 = vadd.f32 %v1063, %v1068
        %v1072 = vmax.f32 %v1070, 0.0
        %v1073 = vmax.f32 %v1071, 0.0
        %v1074 = vld [vmem:[%s5] sm:$0xff]
        %v1075 = vld [vmem:[%s5 + $0x8] sm:$0xff]
        %v1076 = vld [vmem:[%s5 + $0x10] sm:$0xff]
        %v1077 = vld [vmem:[%s5 + $0x18] sm:$0xff]
        %v1078 = vld [vmem:[%s5 + $0x20] sm:$0xff]
        %v1079 = vld [vmem:[%s5 + $0x28] sm:$0xff]
        %v1080 = vld [vmem:[%s5 + $0x30] sm:$0xff]
        %v1081 = vld [vmem:[%s5 + $0x38] sm:$0xff]
        %v1082 = vld [vmem:[%s6 + $0x1] sm:$0x1]
        %v1083 = vperm.slane %v1082, 0
        %1086 = vrot.lane.b32.xlu0 %v1072, 96
        %v1087 = vpop.permute.xlu0 %1086
        %1088 = vrot.lane.b32.xlu0 %v1073, 96
        %v1089 = vpop.permute.xlu0 %1088
        %vm1090 = vcmask 523264
        %v1091 = vsel %vm1090, %v1087, 0
        %v1093 = vsel %vm1090, %v1089, 0
        %1095 = vmatpush.msra.mxu0 0.0
        %1096 = vmatpush.msra.mxu0 0.0
        %1097 = vmatpush.msra.mxu0 0.0
        %1098 = vmatpush.msra.mxu0 0.0
        %1099 = vmatpush.msra.mxu0 0.0
        %1100 = vmatpush.msra.mxu0 0.0
        %1101 = vmatpush.msra.mxu0 0.0
        %1102 = vmatpush.msra.mxu0 0.0
        %v1103 = vand.u32 %v1081, 4294901760
        %1104 = vmatpush.msra.mxu0 %v1103
        %v1105 = vand.u32 %v1080, 4294901760
        %1106 = vmatpush.msra.mxu0 %v1105
        %v1107 = vand.u32 %v1079, 4294901760
        %1108 = vmatpush.msra.mxu0 %v1107
        %v1109 = vand.u32 %v1078, 4294901760
        %1110 = vmatpush.msra.mxu0 %v1109
        %v1111 = vand.u32 %v1077, 4294901760
        %1112 = vmatpush.msra.mxu0 %v1111
        %v1113 = vand.u32 %v1076, 4294901760
        %1114 = vmatpush.msra.mxu0 %v1113
        %v1115 = vand.u32 %v1075, 4294901760
        %1116 = vmatpush.msra.mxu0 %v1115
        %v1117 = vand.u32 %v1074, 4294901760
        %1118 = vmatpush.msra.mxu0 %v1117
        %v1119 = vand.u32 %v1091, 4294901760
        %v1120 = vsub.f32 %v1091, %v1119
        %v1121 = vand.u32 %v1120, 4294901760
        %v1122 = vsub.f32 %v1120, %v1121
        %v1123 = vand.u32 %v1122, 4294901760
        %1124 = vmatmul.f32.gmra.mxu0 %v1123
        %v1125 = vpop.f32.mrf.mxu0
        %v1126 = vadd.f32 %v1083, %v1125
        %v1127 = vand.u32 %v1093, 4294901760
        %v1128 = vsub.f32 %v1093, %v1127
        %v1129 = vand.u32 %v1128, 4294901760
        %v1130 = vsub.f32 %v1128, %v1129
        %v1131 = vand.u32 %v1130, 4294901760
        %1132 = vmatmul.f32.gmra.mxu0 %v1131
        %v1133 = vpop.f32.mrf.mxu0
        %v1134 = vadd.f32 %v1083, %v1133
        %1135 = vdwg.mxu0
        %1136 = vmatpush.msra.mxu0 0.0
        %1137 = vmatpush.msra.mxu0 0.0
        %1138 = vmatpush.msra.mxu0 0.0
        %1139 = vmatpush.msra.mxu0 0.0
        %1140 = vmatpush.msra.mxu0 0.0
        %1141 = vmatpush.msra.mxu0 0.0
        %1142 = vmatpush.msra.mxu0 0.0
        %1143 = vmatpush.msra.mxu0 0.0
        %v1144 = vand.u32 %v1081, 4294901760
        %v1145 = vsub.f32 %v1081, %v1144
        %v1146 = vand.u32 %v1145, 4294901760
        %v1147 = vsub.f32 %v1145, %v1146
        %v1148 = vand.u32 %v1147, 4294901760
        %1149 = vmatpush.msra.mxu0 %v1148
        %v1150 = vand.u32 %v1080, 4294901760
        %v1151 = vsub.f32 %v1080, %v1150
        %v1152 = vand.u32 %v1151, 4294901760
        %v1153 = vsub.f32 %v1151, %v1152
        %v1154 = vand.u32 %v1153, 4294901760
        %1155 = vmatpush.msra.mxu0 %v1154
        %v1156 = vand.u32 %v1079, 4294901760
        %v1157 = vsub.f32 %v1079, %v1156
        %v1158 = vand.u32 %v1157, 4294901760
        %v1159 = vsub.f32 %v1157, %v1158
        %v1160 = vand.u32 %v1159, 4294901760
        %1161 = vmatpush.msra.mxu0 %v1160
        %v1162 = vand.u32 %v1078, 4294901760
        %v1163 = vsub.f32 %v1078, %v1162
        %v1164 = vand.u32 %v1163, 4294901760
        %v1165 = vsub.f32 %v1163, %v1164
        %v1166 = vand.u32 %v1165, 4294901760
        %1167 = vmatpush.msra.mxu0 %v1166
        %v1168 = vand.u32 %v1077, 4294901760
        %v1169 = vsub.f32 %v1077, %v1168
        %v1170 = vand.u32 %v1169, 4294901760
        %v1171 = vsub.f32 %v1169, %v1170
        %v1172 = vand.u32 %v1171, 4294901760
        %1173 = vmatpush.msra.mxu0 %v1172
        %v1174 = vand.u32 %v1076, 4294901760
        %v1175 = vsub.f32 %v1076, %v1174
        %v1176 = vand.u32 %v1175, 4294901760
        %v1177 = vsub.f32 %v1175, %v1176
        %v1178 = vand.u32 %v1177, 4294901760
        %1179 = vmatpush.msra.mxu0 %v1178
        %v1180 = vand.u32 %v1075, 4294901760
        %v1181 = vsub.f32 %v1075, %v1180
        %v1182 = vand.u32 %v1181, 4294901760
        %v1183 = vsub.f32 %v1181, %v1182
        %v1184 = vand.u32 %v1183, 4294901760
        %1185 = vmatpush.msra.mxu0 %v1184
        %v1186 = vand.u32 %v1074, 4294901760
        %v1187 = vsub.f32 %v1074, %v1186
        %v1188 = vand.u32 %v1187, 4294901760
        %v1189 = vsub.f32 %v1187, %v1188
        %v1190 = vand.u32 %v1189, 4294901760
        %1191 = vmatpush.msra.mxu0 %v1190
        %v1192 = vand.u32 %v1091, 4294901760
        %1193 = vmatmul.f32.gmra.mxu0 %v1192
        %v1194 = vpop.f32.mrf.mxu0
        %v1195 = vadd.f32 %v1126, %v1194
        %v1196 = vand.u32 %v1093, 4294901760
        %1197 = vmatmul.f32.gmra.mxu0 %v1196
        %v1198 = vpop.f32.mrf.mxu0
        %v1199 = vadd.f32 %v1134, %v1198
        %1200 = vdwg.mxu0
        %1201 = vmatpush.msra.mxu0 0.0
        %1202 = vmatpush.msra.mxu0 0.0
        %1203 = vmatpush.msra.mxu0 0.0
        %1204 = vmatpush.msra.mxu0 0.0
        %1205 = vmatpush.msra.mxu0 0.0
        %1206 = vmatpush.msra.mxu0 0.0
        %1207 = vmatpush.msra.mxu0 0.0
        %1208 = vmatpush.msra.mxu0 0.0
        %v1209 = vand.u32 %v1081, 4294901760
        %v1210 = vsub.f32 %v1081, %v1209
        %1211 = vmatpush.msra.mxu0 %v1210
        %v1212 = vand.u32 %v1080, 4294901760
        %v1213 = vsub.f32 %v1080, %v1212
        %1214 = vmatpush.msra.mxu0 %v1213
        %v1215 = vand.u32 %v1079, 4294901760
        %v1216 = vsub.f32 %v1079, %v1215
        %1217 = vmatpush.msra.mxu0 %v1216
        %v1218 = vand.u32 %v1078, 4294901760
        %v1219 = vsub.f32 %v1078, %v1218
        %1220 = vmatpush.msra.mxu0 %v1219
        %v1221 = vand.u32 %v1077, 4294901760
        %v1222 = vsub.f32 %v1077, %v1221
        %1223 = vmatpush.msra.mxu0 %v1222
        %v1224 = vand.u32 %v1076, 4294901760
        %v1225 = vsub.f32 %v1076, %v1224
        %1226 = vmatpush.msra.mxu0 %v1225
        %v1227 = vand.u32 %v1075, 4294901760
        %v1228 = vsub.f32 %v1075, %v1227
        %1229 = vmatpush.msra.mxu0 %v1228
        %v1230 = vand.u32 %v1074, 4294901760
        %v1231 = vsub.f32 %v1074, %v1230
        %1232 = vmatpush.msra.mxu0 %v1231
        %v1233 = vand.u32 %v1091, 4294901760
        %v1234 = vsub.f32 %v1091, %v1233
        %1235 = vmatmul.f32.gmra.mxu0 %v1234
        %v1236 = vpop.f32.mrf.mxu0
        %v1237 = vadd.f32 %v1195, %v1236
        %v1238 = vand.u32 %v1093, 4294901760
        %v1239 = vsub.f32 %v1093, %v1238
        %1240 = vmatmul.f32.gmra.mxu0 %v1239
        %v1241 = vpop.f32.mrf.mxu0
        %v1242 = vadd.f32 %v1199, %v1241
        %1243 = vdwg.mxu0
        %1244 = vmatpush.msra.mxu0 0.0
        %1245 = vmatpush.msra.mxu0 0.0
        %1246 = vmatpush.msra.mxu0 0.0
        %1247 = vmatpush.msra.mxu0 0.0
        %1248 = vmatpush.msra.mxu0 0.0
        %1249 = vmatpush.msra.mxu0 0.0
        %1250 = vmatpush.msra.mxu0 0.0
        %1251 = vmatpush.msra.mxu0 0.0
        %v1252 = vand.u32 %v1081, 4294901760
        %1253 = vmatpush.msra.mxu0 %v1252
        %v1254 = vand.u32 %v1080, 4294901760
        %1255 = vmatpush.msra.mxu0 %v1254
        %v1256 = vand.u32 %v1079, 4294901760
        %1257 = vmatpush.msra.mxu0 %v1256
        %v1258 = vand.u32 %v1078, 4294901760
        %1259 = vmatpush.msra.mxu0 %v1258
        %v1260 = vand.u32 %v1077, 4294901760
        %1261 = vmatpush.msra.mxu0 %v1260
        %v1262 = vand.u32 %v1076, 4294901760
        %1263 = vmatpush.msra.mxu0 %v1262
        %v1264 = vand.u32 %v1075, 4294901760
        %1265 = vmatpush.msra.mxu0 %v1264
        %v1266 = vand.u32 %v1074, 4294901760
        %1267 = vmatpush.msra.mxu0 %v1266
        %v1268 = vand.u32 %v1091, 4294901760
        %v1269 = vsub.f32 %v1091, %v1268
        %v1270 = vand.u32 %v1269, 4294901760
        %1271 = vmatmul.f32.gmra.mxu0 %v1270
        %v1272 = vpop.f32.mrf.mxu0
        %v1273 = vadd.f32 %v1237, %v1272
        %v1274 = vand.u32 %v1093, 4294901760
        %v1275 = vsub.f32 %v1093, %v1274
        %v1276 = vand.u32 %v1275, 4294901760
        %1277 = vmatmul.f32.gmra.mxu0 %v1276
        %v1278 = vpop.f32.mrf.mxu0
        %v1279 = vadd.f32 %v1242, %v1278
        %1280 = vdwg.mxu0
        %1281 = vmatpush.msra.mxu0 0.0
        %1282 = vmatpush.msra.mxu0 0.0
        %1283 = vmatpush.msra.mxu0 0.0
        %1284 = vmatpush.msra.mxu0 0.0
        %1285 = vmatpush.msra.mxu0 0.0
        %1286 = vmatpush.msra.mxu0 0.0
        %1287 = vmatpush.msra.mxu0 0.0
        %1288 = vmatpush.msra.mxu0 0.0
        %v1289 = vand.u32 %v1081, 4294901760
        %v1290 = vsub.f32 %v1081, %v1289
        %v1291 = vand.u32 %v1290, 4294901760
        %1292 = vmatpush.msra.mxu0 %v1291
        %v1293 = vand.u32 %v1080, 4294901760
        %v1294 = vsub.f32 %v1080, %v1293
        %v1295 = vand.u32 %v1294, 4294901760
        %1296 = vmatpush.msra.mxu0 %v1295
        %v1297 = vand.u32 %v1079, 4294901760
        %v1298 = vsub.f32 %v1079, %v1297
        %v1299 = vand.u32 %v1298, 4294901760
        %1300 = vmatpush.msra.mxu0 %v1299
        %v1301 = vand.u32 %v1078, 4294901760
        %v1302 = vsub.f32 %v1078, %v1301
        %v1303 = vand.u32 %v1302, 4294901760
        %1304 = vmatpush.msra.mxu0 %v1303
        %v1305 = vand.u32 %v1077, 4294901760
        %v1306 = vsub.f32 %v1077, %v1305
        %v1307 = vand.u32 %v1306, 4294901760
        %1308 = vmatpush.msra.mxu0 %v1307
        %v1309 = vand.u32 %v1076, 4294901760
        %v1310 = vsub.f32 %v1076, %v1309
        %v1311 = vand.u32 %v1310, 4294901760
        %1312 = vmatpush.msra.mxu0 %v1311
        %v1313 = vand.u32 %v1075, 4294901760
        %v1314 = vsub.f32 %v1075, %v1313
        %v1315 = vand.u32 %v1314, 4294901760
        %1316 = vmatpush.msra.mxu0 %v1315
        %v1317 = vand.u32 %v1074, 4294901760
        %v1318 = vsub.f32 %v1074, %v1317
        %v1319 = vand.u32 %v1318, 4294901760
        %1320 = vmatpush.msra.mxu0 %v1319
        %v1321 = vand.u32 %v1091, 4294901760
        %1322 = vmatmul.f32.gmra.mxu0 %v1321
        %v1323 = vpop.f32.mrf.mxu0
        %v1324 = vadd.f32 %v1273, %v1323
        %v1325 = vand.u32 %v1093, 4294901760
        %1326 = vmatmul.f32.gmra.mxu0 %v1325
        %v1327 = vpop.f32.mrf.mxu0
        %v1328 = vadd.f32 %v1279, %v1327
        %1329 = vdwg.mxu0
        %1330 = vmatpush.msra.mxu0 0.0
        %1331 = vmatpush.msra.mxu0 0.0
        %1332 = vmatpush.msra.mxu0 0.0
        %1333 = vmatpush.msra.mxu0 0.0
        %1334 = vmatpush.msra.mxu0 0.0
        %1335 = vmatpush.msra.mxu0 0.0
        %1336 = vmatpush.msra.mxu0 0.0
        %1337 = vmatpush.msra.mxu0 0.0
        %v1338 = vand.u32 %v1081, 4294901760
        %1339 = vmatpush.msra.mxu0 %v1338
        %v1340 = vand.u32 %v1080, 4294901760
        %1341 = vmatpush.msra.mxu0 %v1340
        %v1342 = vand.u32 %v1079, 4294901760
        %1343 = vmatpush.msra.mxu0 %v1342
        %v1344 = vand.u32 %v1078, 4294901760
        %1345 = vmatpush.msra.mxu0 %v1344
        %v1346 = vand.u32 %v1077, 4294901760
        %1347 = vmatpush.msra.mxu0 %v1346
        %v1348 = vand.u32 %v1076, 4294901760
        %1349 = vmatpush.msra.mxu0 %v1348
        %v1350 = vand.u32 %v1075, 4294901760
        %1351 = vmatpush.msra.mxu0 %v1350
        %v1352 = vand.u32 %v1074, 4294901760
        %1353 = vmatpush.msra.mxu0 %v1352
        %v1354 = vand.u32 %v1091, 4294901760
        %1355 = vmatmul.f32.gmra.mxu0 %v1354
        %v1356 = vpop.f32.mrf.mxu0
        %v1357 = vadd.f32 %v1324, %v1356
        %v1358 = vand.u32 %v1093, 4294901760
        %1359 = vmatmul.f32.gmra.mxu0 %v1358
        %v1360 = vpop.f32.mrf.mxu0
        %v1361 = vadd.f32 %v1328, %v1360
        %1362 = vdwg.mxu0
        %1363 = vst.msk [vmem:[%s347] sm:$0xff] %vm368, %v1357
        %1364 = vst.msk [vmem:[%s347 + $0x8] sm:$0xff] %vm368, %v1361
        %s1365 = sand.u32 %s210, 1
        %s1366 = scalar_lea.sflag [#allocation5], %s1365
        %s1367 = sand.u32 %s210, 1
        %s1368 = smul.addr %s1367, 16
        %s1369 = scalar_lea.vmem [#allocation8], %s1368
        // Predicated region
        $region61: #{tpu_custom_call.1} parent=51 // pred_check
          %p1370 = pneg %p220
        $region62: #{tpu_custom_call.1} parent=51 // pred_check_branch
          %1372 = sbr.rel (%p1370) target = $region64
        $region63: #{tpu_custom_call.1} parent=51 // pred_region
          %1374 = vsyncadd %s1366, 0
          %s1375 = smul.addr %s24, 2
          %s1376 = smul.addr %s1375, 8
          %s1377 = scalar_lea.hbm %s8, %s1376
          %s1378 = sshll.u32 %s1369, 4
          %s1379 = int_to_ptr.vmem [resolvable:$true] %s1378
          %s1380 = sshll.u32 %s1377, 4
          %s1381 = int_to_ptr.hbm [resolvable:$true] %s1380
          %1386 = dma.vmem_to_hbm [thread:$0]  %s1379, 256, %s1381, %s1366, 128, 128, 8
        $region64: #{tpu_custom_call.1} parent=51 // pred_fallthru
          _
      $region52: #{tpu_custom_call.1} parent=5 // pred_fallthru
        _
      %p1387 = scmp.le.s32.totalorder 2, %s19
      // Predicated region
      $region65: #{tpu_custom_call.1} parent=5 // pred_check
        %p1388 = pneg %p1387
      $region66: #{tpu_custom_call.1} parent=5 // pred_check_branch
        %1390 = sbr.rel (%p1388) target = $region68
      $region67: #{tpu_custom_call.1} parent=5 // pred_region
        %s1391 = ssub.s32 %s19, 2
        // Predicated region
        $region69: #{tpu_custom_call.1} parent=67 // pred_check
          %p1392 = pneg %p226
        $region70: #{tpu_custom_call.1} parent=67 // pred_check_branch
          %1394 = sbr.rel (%p1392) target = $region72
        $region71: #{tpu_custom_call.1} parent=67 // pred_region
          %s1395 = sand.u32 %s211, 1
          %s1396 = scalar_lea.sflag [#allocation5], %s1395
          %s1397 = sand.u32 %s211, 1
          %s1398 = smul.addr %s1397, 16
          %s1399 = scalar_lea.vmem [#allocation8], %s1398
          %1401 = dma.done %s1396, 256
        $region72: #{tpu_custom_call.1} parent=67 // pred_fallthru
          _
      $region68: #{tpu_custom_call.1} parent=5 // pred_fallthru
        _
    $region6: #{tpu_custom_call.1} parent=1 // loop_footer
      %s23 = sadd.s32 1, %s19
    $region7: #{tpu_custom_call.1} parent=1 // loop_footer_branch
      %18 = sbr.rel target = $region3
    $region8: #{tpu_custom_call.1} parent=1 // loop_exit
      _
    %1402 = vsyncpa [#allocation4], 1
    %s1403 = scalar_lea.sflag [#allocation4], 1
    %1404 = vsyncpa %s1403, 1
    %1405 = vsyncpa [#allocation7], 1
    %1406 = vsyncpa [#allocation5], 1
    %s1407 = scalar_lea.sflag [#allocation5], 1
    %1408 = vsyncpa %s1407, 1

</llo_original>
